<compile_context>
chip_gen: v5e
topology: v5e:2x2
jax: 0.10.0
libtpu: 0.0.40
codegen_flags: <defaults>
</compile_context>

<pallas_src>
import functools

import jax
import jax.numpy as jnp
from jax import lax
from jax.experimental import pallas as pl
from jax.experimental.pallas import tpu as pltpu


def _round_up(x, m):
    return ((x + m - 1) // m) * m


# ----------------------------------------------------------------------------
# Fused Pallas kernel: all SAGEConv layers + ReLU + final (masked) log_softmax
# ----------------------------------------------------------------------------
def _sage_fused_kernel(*refs, num_layers, padded_dims, valid_out):
    # refs = (A, x, [wl_t, wr_t, b] * num_layers, out)
    a_ref, x_ref = refs[0], refs[1]
    out_ref = refs[-1]
    layer_refs = refs[2:-1]

    A = a_ref[...]                          # (Np, Np)  bf16 row-normalized adjacency
    h = x_ref[...]                          # (Np, Cin_pad) f32 activations

    for l in range(num_layers):
        wl_t = layer_refs[3 * l][...]       # (Cin_pad, Cout_pad) bf16  lin_l weight^T
        wr_t = layer_refs[3 * l + 1][...]   # (Cin_pad, Cout_pad) bf16  lin_r weight^T
        b = layer_refs[3 * l + 2][...]      # (1, Cout_pad)       f32

        c_in, c_out = padded_dims[l]
        hb = h.astype(jnp.bfloat16)         # bf16 operands, f32 accumulation

        if c_out < c_in:
            # A @ (h @ Wl^T): the N*N matmul scales with C_out instead of C_in.
            t = jnp.dot(hb, wl_t, preferred_element_type=jnp.float32)
            agg_l = jnp.dot(A, t.astype(jnp.bfloat16),
                            preferred_element_type=jnp.float32)
        else:
            agg = jnp.dot(A, hb, preferred_element_type=jnp.float32)
            agg_l = jnp.dot(agg.astype(jnp.bfloat16), wl_t,
                            preferred_element_type=jnp.float32)

        h_new = agg_l + jnp.dot(hb, wr_t, preferred_element_type=jnp.float32) + b

        if l < num_layers - 1:
            h = jnp.maximum(h_new, 0.0)     # ReLU (dropout: eval-mode no-op)
        else:
            # log_softmax over the feature (lane) dim, masking padded lanes so
            # they contribute exp(-inf)=0 to the logsumexp.
            lane = lax.broadcasted_iota(jnp.int32, h_new.shape, 1)
            z_in = jnp.where(lane < valid_out, h_new,
                             jnp.full_like(h_new, -1e30))
            m = jnp.max(z_in, axis=-1, keepdims=True)
            z = z_in - m
            lse = jnp.log(jnp.sum(jnp.exp(z), axis=-1, keepdims=True))
            h = z - lse

    out_ref[...] = h                        # single lane-dense whole-block store


# ----------------------------------------------------------------------------
# Adjacency (hoisted out of the per-forward hot path; reuse across calls)
# ----------------------------------------------------------------------------
def build_mean_adjacency(edge_index, edge_weight, num_nodes, num_nodes_pad,
                         dtype=jnp.bfloat16):
    """A[i, j] = w_{j->i} / in_degree(i), zero-padded to (Np, Np), cast to bf16."""
    src = edge_index[0]
    dst = edge_index[1]
    if edge_weight is None:
        edge_weight = jnp.ones(src.shape, jnp.float32)
    A = jnp.zeros((num_nodes_pad, num_nodes_pad), jnp.float32)
    A = A.at[dst, src].add(edge_weight)
    deg = jnp.zeros((num_nodes_pad,), jnp.float32).at[dst].add(1.0)
    A = A / jnp.maximum(deg, 1.0)[:, None]
    return A.astype(dtype)


# ----------------------------------------------------------------------------
# Wrapper
# ----------------------------------------------------------------------------
def sage_forward(params, x, edge_index=None, edge_weight=None, adjacency=None):
    """Pallas SAGE forward: log_softmax(SAGEConv stack (x, edge_index))."""
    num_nodes, in_channels = x.shape
    num_layers = len(params)
    out_channels = params[-1]['w_l'].shape[0]

    n_pad = _round_up(num_nodes, 128)

    if adjacency is None:
        adjacency = build_mean_adjacency(edge_index, edge_weight,
                                         num_nodes, n_pad)
    assert adjacency.shape == (n_pad, n_pad)

    # True and padded channel dims per layer.
    dims = [in_channels] + [p['w_l'].shape[0] for p in params]
    pdims = [_round_up(d, 128) for d in dims]
    padded_dims = tuple((pdims[l], pdims[l + 1]) for l in range(num_layers))

    # Lane-dense padded inputs: x (f32), weights^T (bf16), bias (f32).
    x_pad = jnp.pad(x.astype(jnp.float32),
                    ((0, n_pad - num_nodes), (0, pdims[0] - dims[0])))
    flat = []
    for l, p in enumerate(params):
        ci, co = dims[l], dims[l + 1]
        cip, cop = pdims[l], pdims[l + 1]
        wl_t = jnp.pad(jnp.transpose(p['w_l']), ((0, cip - ci), (0, cop - co)))
        wr_t = jnp.pad(jnp.transpose(p['w_r']), ((0, cip - ci), (0, cop - co)))
        b = jnp.pad(p['b'], (0, cop - co))[None, :]
        flat.append(wl_t.astype(jnp.bfloat16))
        flat.append(wr_t.astype(jnp.bfloat16))
        flat.append(b.astype(jnp.float32))

    n_inputs = 2 + len(flat)
    cout_pad = pdims[-1]

    # Cost / VMEM hints.
    flops = 0
    for (cip, cop) in padded_dims:
        flops += 2 * n_pad * n_pad * min(cip, cop)   # adjacency matmul
        flops += 2 * n_pad * cip * cop               # lin_l
        flops += 2 * n_pad * cip * cop               # lin_r
    transcendentals = n_pad * cout_pad               # exp in log_softmax
    out_bytes = n_pad * cout_pad * 4
    in_bytes = (adjacency.size * 2 + x_pad.size * 4
                + sum(int(a.size) * a.dtype.itemsize for a in flat))
    resident_bytes = in_bytes + out_bytes
    vmem_limit = min(100 << 20, 2 * resident_bytes + (4 << 20))

    kernel = functools.partial(_sage_fused_kernel,
                               num_layers=num_layers,
                               padded_dims=padded_dims,
                               valid_out=out_channels)

    out_pad = pl.pallas_call(
        kernel,
        out_shape=jax.ShapeDtypeStruct((n_pad, cout_pad), jnp.float32),
        in_specs=[pl.BlockSpec(memory_space=pltpu.MemorySpace.VMEM)] * n_inputs,
        out_specs=pl.BlockSpec(memory_space=pltpu.MemorySpace.VMEM),
        compiler_params=pltpu.CompilerParams(vmem_limit_bytes=int(vmem_limit)),
        cost_estimate=pl.CostEstimate(flops=int(flops),
                                      transcendentals=int(transcendentals),
                                      bytes_accessed=int(in_bytes + out_bytes)),
    )(adjacency, x_pad, *flat)

    return out_pad[:num_nodes, :out_channels]


# ----------------------------------------------------------------------------
# Parameter init (PyG SAGEConv shapes: lin_l has bias, lin_r has none)
# ----------------------------------------------------------------------------
def init_sage_params(key, in_channels, hidden_channels, out_channels, num_layers):
    dims = [in_channels] + [hidden_channels] * (num_layers - 1) + [out_channels]
    params = []
    for l in range(num_layers):
        c_in, c_out = dims[l], dims[l + 1]
        key, k0, k1, k2 = jax.random.split(key, 4)
        bound = 1.0 / float(c_in) ** 0.5
        params.append(dict(
            w_l=jax.random.uniform(k0, (c_out, c_in), jnp.float32, -bound, bound),
            w_r=jax.random.uniform(k1, (c_out, c_in), jnp.float32, -bound, bound),
            b=jax.random.uniform(k2, (c_out,), jnp.float32, -bound, bound),
        ))
    return params


# ----------------------------------------------------------------------------
# Pure-JAX f32 reference for correctness checking
# ----------------------------------------------------------------------------
def sage_reference(params, x, edge_index, edge_weight=None):
    hi = jax.lax.Precision.HIGHEST
    num_nodes = x.shape[0]
    src, dst = edge_index[0], edge_index[1]
    if edge_weight is None:
        edge_weight = jnp.ones(src.shape, jnp.float32)
    A = jnp.zeros((num_nodes, num_nodes), jnp.float32).at[dst, src].add(edge_weight)
    deg = jnp.zeros((num_nodes,), jnp.float32).at[dst].add(1.0)
    A = A / jnp.maximum(deg, 1.0)[:, None]

    h = x
    L = len(params)
    for l, p in enumerate(params):
        agg = jnp.dot(A, h, precision=hi)
        h_new = (jnp.dot(agg, p['w_l'].T, precision=hi)
                 + jnp.dot(h, p['w_r'].T, precision=hi)
                 + p['b'])
        if l < L - 1:
            h = jax.nn.relu(h_new)
        else:
            h = jax.nn.log_softmax(h_new, axis=-1)
    return h


if __name__ == "__main__":
    NUM_NODES, NUM_EDGES = 32, 96
    IN_CHANNELS, HIDDEN, OUT_CHANNELS, NUM_LAYERS = 8, 32, 8, 3
    DROPOUT = 0.5  # inference-mode no-op

    key = jax.random.PRNGKey(0)
    kx, ke, kp = jax.random.split(key, 3)
    x = jax.random.normal(kx, (NUM_NODES, IN_CHANNELS), jnp.float32)
    edge_index = jax.random.randint(ke, (2, NUM_EDGES), 0, NUM_NODES, jnp.int32)
    params = init_sage_params(kp, IN_CHANNELS, HIDDEN, OUT_CHANNELS, NUM_LAYERS)

    # Hoisted adjacency build (reused across forward calls).
    n_pad = _round_up(NUM_NODES, 128)
    A = build_mean_adjacency(edge_index, None, NUM_NODES, n_pad)

    out = jax.block_until_ready(sage_forward(params, x, adjacency=A))
    ref = jax.block_until_ready(sage_reference(params, x, edge_index))

    assert out.shape == (NUM_NODES, OUT_CHANNELS)
    # bf16 MXU operands (f32 accumulation): slightly looser tolerance than the
    # f32 HIGHEST reference.
    assert jnp.allclose(out, ref, atol=3e-2, rtol=3e-2), (
        float(jnp.max(jnp.abs(out - ref))))

    print("KERNEL_OK")
</pallas_src>

<mosaic_0001>
module attributes {stable_mosaic.version = 11 : i64} {
  func.func @_sage_fused_kernel(%arg0: memref<128x128xbf16, #tpu.memory_space<vmem>>, %arg1: memref<128x128xf32, #tpu.memory_space<vmem>>, %arg2: memref<128x128xbf16, #tpu.memory_space<vmem>>, %arg3: memref<128x128xbf16, #tpu.memory_space<vmem>>, %arg4: memref<1x128xf32, #tpu.memory_space<vmem>>, %arg5: memref<128x128xbf16, #tpu.memory_space<vmem>>, %arg6: memref<128x128xbf16, #tpu.memory_space<vmem>>, %arg7: memref<1x128xf32, #tpu.memory_space<vmem>>, %arg8: memref<128x128xbf16, #tpu.memory_space<vmem>>, %arg9: memref<128x128xbf16, #tpu.memory_space<vmem>>, %arg10: memref<1x128xf32, #tpu.memory_space<vmem>>, %arg11: memref<128x128xf32, #tpu.memory_space<vmem>>) attributes {dimension_semantics = [], scalar_prefetch = 0 : i64, scratch_operands = 0 : i64, tpu.core_type = #tpu.core_type<tc>} {
    %c0 = arith.constant 0 : index
    %c0_0 = arith.constant 0 : index
    %0 = vector.load %arg0[%c0, %c0_0] : memref<128x128xbf16, #tpu.memory_space<vmem>>, vector<128x128xbf16>
    %c0_1 = arith.constant 0 : index
    %c0_2 = arith.constant 0 : index
    %1 = vector.load %arg1[%c0_1, %c0_2] : memref<128x128xf32, #tpu.memory_space<vmem>>, vector<128x128xf32>
    %c0_3 = arith.constant 0 : index
    %c0_4 = arith.constant 0 : index
    %2 = vector.load %arg2[%c0_3, %c0_4] : memref<128x128xbf16, #tpu.memory_space<vmem>>, vector<128x128xbf16>
    %c0_5 = arith.constant 0 : index
    %c0_6 = arith.constant 0 : index
    %3 = vector.load %arg3[%c0_5, %c0_6] : memref<128x128xbf16, #tpu.memory_space<vmem>>, vector<128x128xbf16>
    %c0_7 = arith.constant 0 : index
    %c0_8 = arith.constant 0 : index
    %4 = vector.load %arg4[%c0_7, %c0_8] : memref<1x128xf32, #tpu.memory_space<vmem>>, vector<1x128xf32>
    %5 = arith.truncf %1 : vector<128x128xf32> to vector<128x128xbf16>
    %cst = arith.constant dense<0.000000e+00> : vector<128x128xf32>
    %6 = tpu.matmul %0, %5, %cst {dimension_numbers = #tpu.dot_dimension_numbers<[1], [0], [0], [1], [0, 0, 1, 1], [], []>} : vector<128x128xbf16>, vector<128x128xbf16>, vector<128x128xf32> -> vector<128x128xf32>
    %7 = arith.truncf %6 : vector<128x128xf32> to vector<128x128xbf16>
    %cst_9 = arith.constant dense<0.000000e+00> : vector<128x128xf32>
    %8 = tpu.matmul %7, %2, %cst_9 {dimension_numbers = #tpu.dot_dimension_numbers<[1], [0], [0], [1], [0, 0, 1, 1], [], []>} : vector<128x128xbf16>, vector<128x128xbf16>, vector<128x128xf32> -> vector<128x128xf32>
    %cst_10 = arith.constant dense<0.000000e+00> : vector<128x128xf32>
    %9 = tpu.matmul %5, %3, %cst_10 {dimension_numbers = #tpu.dot_dimension_numbers<[1], [0], [0], [1], [0, 0, 1, 1], [], []>} : vector<128x128xbf16>, vector<128x128xbf16>, vector<128x128xf32> -> vector<128x128xf32>
    %10 = arith.addf %8, %9 : vector<128x128xf32>
    %11 = vector.broadcast %4 : vector<1x128xf32> to vector<128x128xf32>
    %12 = arith.addf %10, %11 : vector<128x128xf32>
    %cst_11 = arith.constant 0.000000e+00 : f32
    %13 = vector.broadcast %cst_11 : f32 to vector<128x128xf32>
    %14 = arith.maximumf %12, %13 : vector<128x128xf32>
    %c0_12 = arith.constant 0 : index
    %c0_13 = arith.constant 0 : index
    %15 = vector.load %arg5[%c0_12, %c0_13] : memref<128x128xbf16, #tpu.memory_space<vmem>>, vector<128x128xbf16>
    %c0_14 = arith.constant 0 : index
    %c0_15 = arith.constant 0 : index
    %16 = vector.load %arg6[%c0_14, %c0_15] : memref<128x128xbf16, #tpu.memory_space<vmem>>, vector<128x128xbf16>
    %c0_16 = arith.constant 0 : index
    %c0_17 = arith.constant 0 : index
    %17 = vector.load %arg7[%c0_16, %c0_17] : memref<1x128xf32, #tpu.memory_space<vmem>>, vector<1x128xf32>
    %18 = arith.truncf %14 : vector<128x128xf32> to vector<128x128xbf16>
    %cst_18 = arith.constant dense<0.000000e+00> : vector<128x128xf32>
    %19 = tpu.matmul %0, %18, %cst_18 {dimension_numbers = #tpu.dot_dimension_numbers<[1], [0], [0], [1], [0, 0, 1, 1], [], []>} : vector<128x128xbf16>, vector<128x128xbf16>, vector<128x128xf32> -> vector<128x128xf32>
    %20 = arith.truncf %19 : vector<128x128xf32> to vector<128x128xbf16>
    %cst_19 = arith.constant dense<0.000000e+00> : vector<128x128xf32>
    %21 = tpu.matmul %20, %15, %cst_19 {dimension_numbers = #tpu.dot_dimension_numbers<[1], [0], [0], [1], [0, 0, 1, 1], [], []>} : vector<128x128xbf16>, vector<128x128xbf16>, vector<128x128xf32> -> vector<128x128xf32>
    %cst_20 = arith.constant dense<0.000000e+00> : vector<128x128xf32>
    %22 = tpu.matmul %18, %16, %cst_20 {dimension_numbers = #tpu.dot_dimension_numbers<[1], [0], [0], [1], [0, 0, 1, 1], [], []>} : vector<128x128xbf16>, vector<128x128xbf16>, vector<128x128xf32> -> vector<128x128xf32>
    %23 = arith.addf %21, %22 : vector<128x128xf32>
    %24 = vector.broadcast %17 : vector<1x128xf32> to vector<128x128xf32>
    %25 = arith.addf %23, %24 : vector<128x128xf32>
    %cst_21 = arith.constant 0.000000e+00 : f32
    %26 = vector.broadcast %cst_21 : f32 to vector<128x128xf32>
    %27 = arith.maximumf %25, %26 : vector<128x128xf32>
    %c0_22 = arith.constant 0 : index
    %c0_23 = arith.constant 0 : index
    %28 = vector.load %arg8[%c0_22, %c0_23] : memref<128x128xbf16, #tpu.memory_space<vmem>>, vector<128x128xbf16>
    %c0_24 = arith.constant 0 : index
    %c0_25 = arith.constant 0 : index
    %29 = vector.load %arg9[%c0_24, %c0_25] : memref<128x128xbf16, #tpu.memory_space<vmem>>, vector<128x128xbf16>
    %c0_26 = arith.constant 0 : index
    %c0_27 = arith.constant 0 : index
    %30 = vector.load %arg10[%c0_26, %c0_27] : memref<1x128xf32, #tpu.memory_space<vmem>>, vector<1x128xf32>
    %31 = arith.truncf %27 : vector<128x128xf32> to vector<128x128xbf16>
    %cst_28 = arith.constant dense<0.000000e+00> : vector<128x128xf32>
    %32 = tpu.matmul %0, %31, %cst_28 {dimension_numbers = #tpu.dot_dimension_numbers<[1], [0], [0], [1], [0, 0, 1, 1], [], []>} : vector<128x128xbf16>, vector<128x128xbf16>, vector<128x128xf32> -> vector<128x128xf32>
    %33 = arith.truncf %32 : vector<128x128xf32> to vector<128x128xbf16>
    %cst_29 = arith.constant dense<0.000000e+00> : vector<128x128xf32>
    %34 = tpu.matmul %33, %28, %cst_29 {dimension_numbers = #tpu.dot_dimension_numbers<[1], [0], [0], [1], [0, 0, 1, 1], [], []>} : vector<128x128xbf16>, vector<128x128xbf16>, vector<128x128xf32> -> vector<128x128xf32>
    %cst_30 = arith.constant dense<0.000000e+00> : vector<128x128xf32>
    %35 = tpu.matmul %31, %29, %cst_30 {dimension_numbers = #tpu.dot_dimension_numbers<[1], [0], [0], [1], [0, 0, 1, 1], [], []>} : vector<128x128xbf16>, vector<128x128xbf16>, vector<128x128xf32> -> vector<128x128xf32>
    %36 = arith.addf %34, %35 : vector<128x128xf32>
    %37 = vector.broadcast %30 : vector<1x128xf32> to vector<128x128xf32>
    %38 = arith.addf %36, %37 : vector<128x128xf32>
    %39 = tpu.iota {dimensions = array<i32: 1>} : vector<128x128xi32>
    %c8_i32 = arith.constant 8 : i32
    %40 = vector.broadcast %c8_i32 : i32 to vector<128x128xi32>
    %41 = arith.cmpi slt, %39, %40 : vector<128x128xi32>
    %cst_31 = arith.constant -1.000000e+30 : f32
    %42 = vector.broadcast %cst_31 : f32 to vector<128x128xf32>
    %43 = arith.select %41, %38, %42 : vector<128x128xi1>, vector<128x128xf32>
    %cst_32 = arith.constant dense<0xFF800000> : vector<128xf32>
    %44 = vector.multi_reduction <maximumf>, %43, %cst_32 [1] : vector<128x128xf32> to vector<128xf32>
    %45 = vector.shape_cast %44 : vector<128xf32> to vector<128x1xf32>
    %46 = vector.broadcast %45 : vector<128x1xf32> to vector<128x128xf32>
    %47 = arith.subf %43, %46 : vector<128x128xf32>
    %48 = math.exp %47 : vector<128x128xf32>
    %cst_33 = arith.constant dense<0.000000e+00> : vector<128xf32>
    %49 = vector.multi_reduction <add>, %48, %cst_33 [1] : vector<128x128xf32> to vector<128xf32>
    %50 = vector.shape_cast %49 : vector<128xf32> to vector<128x1xf32>
    %51 = math.log %50 : vector<128x1xf32>
    %52 = vector.broadcast %51 : vector<128x1xf32> to vector<128x128xf32>
    %53 = arith.subf %47, %52 : vector<128x128xf32>
    %c0_34 = arith.constant 0 : index
    %c0_35 = arith.constant 0 : index
    %54 = vector.load %arg11[%c0_34, %c0_35] : memref<128x128xf32, #tpu.memory_space<vmem>>, vector<128x128xf32>
    tpu.vector_store %arg11[%c0_34, %c0_35], %53 {strides = array<i32>} : memref<128x128xf32, #tpu.memory_space<vmem>>, vector<128x128xf32>,
    return
  }
}

</mosaic_0001>

<llo_original>
// kernel: tpu_custom_call.1
$region0: #{tpu_custom_call.1}
  #allocation0 [shape = 'u32[]', space=smem, size = 0x4, offset = 0x4, fixed_abs, tag = 'smem constant byte address 0x4 - core index']
  #allocation1 [shape = 'u32[72,128]{1,0:T(1,128)}', space=vmem, size = 0x9000, scoped, tag = 'internal scratch']
  %s0 = inlined_call_operand.hbm [shape: bf16[128,128], index: 0, kind: input, shape index: {}]
  %s1 = inlined_call_operand.hbm [shape: f32[128,128], index: 1, kind: input, shape index: {}]
  %s2 = inlined_call_operand.hbm [shape: bf16[128,128], index: 2, kind: input, shape index: {}]
  %s3 = inlined_call_operand.hbm [shape: bf16[128,128], index: 3, kind: input, shape index: {}]
  %s4 = inlined_call_operand.vmem [shape: f32[1,128], index: 4, kind: input, shape index: {}]
  %s5 = inlined_call_operand.hbm [shape: bf16[128,128], index: 5, kind: input, shape index: {}]
  %s6 = inlined_call_operand.hbm [shape: bf16[128,128], index: 6, kind: input, shape index: {}]
  %s7 = inlined_call_operand.vmem [shape: f32[1,128], index: 7, kind: input, shape index: {}]
  %s8 = inlined_call_operand.hbm [shape: bf16[128,128], index: 8, kind: input, shape index: {}]
  %s9 = inlined_call_operand.hbm [shape: bf16[128,128], index: 9, kind: input, shape index: {}]
  %s10 = inlined_call_operand.vmem [shape: f32[1,128], index: 10, kind: input, shape index: {}]
  %s11 = inlined_call_operand.hbm [shape: f32[128,128], index: 11, kind: output, shape index: {}]
  %s12 = sld [smem:[#allocation0]]
  $region86: #{tpu_custom_call.1} parent=0
    _
  %s14 = ssub.s32 1, %s12
  %s15 = scalar_select 0, %s14, %s12
  $region1: #{tpu_custom_call.1} parent=0
    #allocation2 [shape = 'u8[32768]{0}', space=vmem, size = 0x8000, scoped, tag = 'input window, operand 0, single buffered']
    #allocation3 [shape = 's32[1]{0}', space=sflag, size = 0x4, scoped, tag = 'scoped memory for tpu_custom_call.1']
    #allocation4 [shape = 's32[1]{0}', space=sflag, size = 0x4, scoped, tag = 'scoped memory for tpu_custom_call.1']
    #allocation5 [shape = 'u8[65536]{0}', space=vmem, size = 0x10000, scoped, tag = 'input window, operand 1, single buffered']
    #allocation6 [shape = 's32[1]{0}', space=sflag, size = 0x4, scoped, tag = 'scoped memory for tpu_custom_call.1']
    #allocation7 [shape = 'u8[32768]{0}', space=vmem, size = 0x8000, scoped, tag = 'input window, operand 2, single buffered']
    #allocation8 [shape = 'u8[32768]{0}', space=vmem, size = 0x8000, scoped, tag = 'input window, operand 3, single buffered']
    #allocation9 [shape = 's32[1]{0}', space=sflag, size = 0x4, scoped, tag = 'scoped memory for tpu_custom_call.1']
    #allocation10 [shape = 'u8[32768]{0}', space=vmem, size = 0x8000, scoped, tag = 'input window, operand 5, single buffered']
    #allocation11 [shape = 'u8[32768]{0}', space=vmem, size = 0x8000, scoped, tag = 'input window, operand 6, single buffered']
    #allocation12 [shape = 's32[1]{0}', space=sflag, size = 0x4, scoped, tag = 'scoped memory for tpu_custom_call.1']
    #allocation13 [shape = 'u8[32768]{0}', space=vmem, size = 0x8000, scoped, tag = 'input window, operand 8, single buffered']
    #allocation14 [shape = 'u8[32768]{0}', space=vmem, size = 0x8000, scoped, tag = 'input window, operand 9, single buffered']
    #allocation15 [shape = 's32[1]{0}', space=sflag, size = 0x4, scoped, tag = 'scoped memory for tpu_custom_call.1']
    #allocation16 [shape = 'u8[65536]{0}', space=vmem, size = 0x10000, scoped, tag = 'output window, operand 0, single buffered']
    %16 = vsyncpa [#allocation3], 0
    %17 = vsyncpa [#allocation6], 0
    %18 = vsyncpa [#allocation9], 0
    %19 = vsyncpa [#allocation12], 0
    %20 = vsyncpa [#allocation15], 0
    %21 = vsyncpa [#allocation4], 0
    // Predicated region
    $region2: #{tpu_custom_call.1} parent=1 // pred_check
      _
    $region3: #{tpu_custom_call.1} parent=1 // pred_check_branch
      %23 = sbr.rel (0) target = $region5
    $region4: #{tpu_custom_call.1} parent=1 // pred_region
      %25 = vsyncadd [#allocation3], 0
      %s26 = sshll.u32 %s0, 4
      %s27 = int_to_ptr.hbm [resolvable:$true] %s26
      %s28 = sshll.u32 [#allocation2], 4
      %s29 = int_to_ptr.vmem [resolvable:$true] %s28
      %34 = dma.hbm_to_vmem [thread:$0]  %s27, 1024, %s29, [#allocation3], 64, 64, 4
    $region5: #{tpu_custom_call.1} parent=1 // pred_fallthru
      _
    // Predicated region
    $region6: #{tpu_custom_call.1} parent=1 // pred_check
      _
    $region7: #{tpu_custom_call.1} parent=1 // pred_check_branch
      %36 = sbr.rel (0) target = $region9
    $region8: #{tpu_custom_call.1} parent=1 // pred_region
      %38 = vsyncadd [#allocation6], 0
      %s39 = sshll.u32 %s1, 4
      %s40 = int_to_ptr.hbm [resolvable:$true] %s39
      %s41 = sshll.u32 [#allocation5], 4
      %s42 = int_to_ptr.vmem [resolvable:$true] %s41
      %47 = dma.hbm_to_vmem [thread:$0]  %s40, 2048, %s42, [#allocation6], 128, 128, 8
    $region9: #{tpu_custom_call.1} parent=1 // pred_fallthru
      _
    // Predicated region
    $region10: #{tpu_custom_call.1} parent=1 // pred_check
      _
    $region11: #{tpu_custom_call.1} parent=1 // pred_check_branch
      %49 = sbr.rel (0) target = $region13
    $region12: #{tpu_custom_call.1} parent=1 // pred_region
      %51 = vsyncadd [#allocation6], 0
      %s52 = sshll.u32 %s2, 4
      %s53 = int_to_ptr.hbm [resolvable:$true] %s52
      %s54 = sshll.u32 [#allocation7], 4
      %s55 = int_to_ptr.vmem [resolvable:$true] %s54
      %60 = dma.hbm_to_vmem [thread:$0]  %s53, 1024, %s55, [#allocation6], 64, 64, 4
    $region13: #{tpu_custom_call.1} parent=1 // pred_fallthru
      _
    // Predicated region
    $region14: #{tpu_custom_call.1} parent=1 // pred_check
      _
    $region15: #{tpu_custom_call.1} parent=1 // pred_check_branch
      %62 = sbr.rel (0) target = $region17
    $region16: #{tpu_custom_call.1} parent=1 // pred_region
      %64 = vsyncadd [#allocation9], 0
      %s65 = sshll.u32 %s3, 4
      %s66 = int_to_ptr.hbm [resolvable:$true] %s65
      %s67 = sshll.u32 [#allocation8], 4
      %s68 = int_to_ptr.vmem [resolvable:$true] %s67
      %73 = dma.hbm_to_vmem [thread:$0]  %s66, 1024, %s68, [#allocation9], 64, 64, 4
    $region17: #{tpu_custom_call.1} parent=1 // pred_fallthru
      _
    // Predicated region
    $region18: #{tpu_custom_call.1} parent=1 // pred_check
      _
    $region19: #{tpu_custom_call.1} parent=1 // pred_check_branch
      %75 = sbr.rel (0) target = $region21
    $region20: #{tpu_custom_call.1} parent=1 // pred_region
      _
    $region21: #{tpu_custom_call.1} parent=1 // pred_fallthru
      _
    // Predicated region
    $region22: #{tpu_custom_call.1} parent=1 // pred_check
      _
    $region23: #{tpu_custom_call.1} parent=1 // pred_check_branch
      %77 = sbr.rel (0) target = $region25
    $region24: #{tpu_custom_call.1} parent=1 // pred_region
      %79 = vsyncadd [#allocation9], 0
      %s80 = sshll.u32 %s5, 4
      %s81 = int_to_ptr.hbm [resolvable:$true] %s80
      %s82 = sshll.u32 [#allocation10], 4
      %s83 = int_to_ptr.vmem [resolvable:$true] %s82
      %88 = dma.hbm_to_vmem [thread:$0]  %s81, 1024, %s83, [#allocation9], 64, 64, 4
    $region25: #{tpu_custom_call.1} parent=1 // pred_fallthru
      _
    // Predicated region
    $region26: #{tpu_custom_call.1} parent=1 // pred_check
      _
    $region27: #{tpu_custom_call.1} parent=1 // pred_check_branch
      %90 = sbr.rel (0) target = $region29
    $region28: #{tpu_custom_call.1} parent=1 // pred_region
      %92 = vsyncadd [#allocation12], 0
      %s93 = sshll.u32 %s6, 4
      %s94 = int_to_ptr.hbm [resolvable:$true] %s93
      %s95 = sshll.u32 [#allocation11], 4
      %s96 = int_to_ptr.vmem [resolvable:$true] %s95
      %101 = dma.hbm_to_vmem [thread:$0]  %s94, 1024, %s96, [#allocation12], 64, 64, 4
    $region29: #{tpu_custom_call.1} parent=1 // pred_fallthru
      _
    // Predicated region
    $region30: #{tpu_custom_call.1} parent=1 // pred_check
      _
    $region31: #{tpu_custom_call.1} parent=1 // pred_check_branch
      %103 = sbr.rel (0) target = $region33
    $region32: #{tpu_custom_call.1} parent=1 // pred_region
      _
    $region33: #{tpu_custom_call.1} parent=1 // pred_fallthru
      _
    // Predicated region
    $region34: #{tpu_custom_call.1} parent=1 // pred_check
      _
    $region35: #{tpu_custom_call.1} parent=1 // pred_check_branch
      %105 = sbr.rel (0) target = $region37
    $region36: #{tpu_custom_call.1} parent=1 // pred_region
      %107 = vsyncadd [#allocation12], 0
      %s108 = sshll.u32 %s8, 4
      %s109 = int_to_ptr.hbm [resolvable:$true] %s108
      %s110 = sshll.u32 [#allocation13], 4
      %s111 = int_to_ptr.vmem [resolvable:$true] %s110
      %116 = dma.hbm_to_vmem [thread:$0]  %s109, 1024, %s111, [#allocation12], 64, 64, 4
    $region37: #{tpu_custom_call.1} parent=1 // pred_fallthru
      _
    // Predicated region
    $region38: #{tpu_custom_call.1} parent=1 // pred_check
      _
    $region39: #{tpu_custom_call.1} parent=1 // pred_check_branch
      %118 = sbr.rel (0) target = $region41
    $region40: #{tpu_custom_call.1} parent=1 // pred_region
      %120 = vsyncadd [#allocation15], 0
      %s121 = sshll.u32 %s9, 4
      %s122 = int_to_ptr.hbm [resolvable:$true] %s121
      %s123 = sshll.u32 [#allocation14], 4
      %s124 = int_to_ptr.vmem [resolvable:$true] %s123
      %129 = dma.hbm_to_vmem [thread:$0]  %s122, 1024, %s124, [#allocation15], 64, 64, 4
    $region41: #{tpu_custom_call.1} parent=1 // pred_fallthru
      _
    // Predicated region
    $region42: #{tpu_custom_call.1} parent=1 // pred_check
      _
    $region43: #{tpu_custom_call.1} parent=1 // pred_check_branch
      %131 = sbr.rel (0) target = $region45
    $region44: #{tpu_custom_call.1} parent=1 // pred_region
      _
    $region45: #{tpu_custom_call.1} parent=1 // pred_fallthru
      _
    // Predicated region
    $region46: #{tpu_custom_call.1} parent=1 // pred_check
      _
    $region47: #{tpu_custom_call.1} parent=1 // pred_check_branch
      %133 = sbr.rel (0) target = $region49
    $region48: #{tpu_custom_call.1} parent=1 // pred_region
      %135 = dma.done [#allocation3], 1024
    $region49: #{tpu_custom_call.1} parent=1 // pred_fallthru
      _
    // Predicated region
    $region50: #{tpu_custom_call.1} parent=1 // pred_check
      _
    $region51: #{tpu_custom_call.1} parent=1 // pred_check_branch
      %137 = sbr.rel (0) target = $region53
    $region52: #{tpu_custom_call.1} parent=1 // pred_region
      %139 = dma.done [#allocation6], 2048
    $region53: #{tpu_custom_call.1} parent=1 // pred_fallthru
      _
    // Predicated region
    $region54: #{tpu_custom_call.1} parent=1 // pred_check
      _
    $region55: #{tpu_custom_call.1} parent=1 // pred_check_branch
      %141 = sbr.rel (0) target = $region57
    $region56: #{tpu_custom_call.1} parent=1 // pred_region
      %143 = dma.done [#allocation6], 1024
    $region57: #{tpu_custom_call.1} parent=1 // pred_fallthru
      _
    // Predicated region
    $region58: #{tpu_custom_call.1} parent=1 // pred_check
      _
    $region59: #{tpu_custom_call.1} parent=1 // pred_check_branch
      %145 = sbr.rel (0) target = $region61
    $region60: #{tpu_custom_call.1} parent=1 // pred_region
      %147 = dma.done [#allocation9], 1024
    $region61: #{tpu_custom_call.1} parent=1 // pred_fallthru
      _
    // Predicated region
    $region62: #{tpu_custom_call.1} parent=1 // pred_check
      _
    $region63: #{tpu_custom_call.1} parent=1 // pred_check_branch
      %149 = sbr.rel (0) target = $region65
    $region64: #{tpu_custom_call.1} parent=1 // pred_region
      %151 = dma.done [#allocation9], 1024
    $region65: #{tpu_custom_call.1} parent=1 // pred_fallthru
      _
    // Predicated region
    $region66: #{tpu_custom_call.1} parent=1 // pred_check
      _
    $region67: #{tpu_custom_call.1} parent=1 // pred_check_branch
      %153 = sbr.rel (0) target = $region69
    $region68: #{tpu_custom_call.1} parent=1 // pred_region
      %155 = dma.done [#allocation12], 1024
    $region69: #{tpu_custom_call.1} parent=1 // pred_fallthru
      _
    // Predicated region
    $region70: #{tpu_custom_call.1} parent=1 // pred_check
      _
    $region71: #{tpu_custom_call.1} parent=1 // pred_check_branch
      %157 = sbr.rel (0) target = $region73
    $region72: #{tpu_custom_call.1} parent=1 // pred_region
      %159 = dma.done [#allocation12], 1024
    $region73: #{tpu_custom_call.1} parent=1 // pred_fallthru
      _
    // Predicated region
    $region74: #{tpu_custom_call.1} parent=1 // pred_check
      _
    $region75: #{tpu_custom_call.1} parent=1 // pred_check_branch
      %161 = sbr.rel (0) target = $region77
    $region76: #{tpu_custom_call.1} parent=1 // pred_region
      %163 = dma.done [#allocation15], 1024
    $region77: #{tpu_custom_call.1} parent=1 // pred_fallthru
      _
    %v164 = vld [vmem:[#allocation2] sm:$0xf]
    %v165 = vld [vmem:[#allocation2 + $0x4] sm:$0xf]
    %v166 = vld [vmem:[#allocation2 + $0x8] sm:$0xf]
    %v167 = vld [vmem:[#allocation2 + $0xc] sm:$0xf]
    %v168 = vld [vmem:[#allocation2 + $0x10] sm:$0xf]
    %v169 = vld [vmem:[#allocation2 + $0x14] sm:$0xf]
    %v170 = vld [vmem:[#allocation2 + $0x18] sm:$0xf]
    %v171 = vld [vmem:[#allocation2 + $0x1c] sm:$0xf]
    %v172 = vld [vmem:[#allocation2 + $0x20] sm:$0xf]
    %v173 = vld [vmem:[#allocation2 + $0x24] sm:$0xf]
    %v174 = vld [vmem:[#allocation2 + $0x28] sm:$0xf]
    %v175 = vld [vmem:[#allocation2 + $0x2c] sm:$0xf]
    %v176 = vld [vmem:[#allocation2 + $0x30] sm:$0xf]
    %v177 = vld [vmem:[#allocation2 + $0x34] sm:$0xf]
    %v178 = vld [vmem:[#allocation2 + $0x38] sm:$0xf]
    %v179 = vld [vmem:[#allocation2 + $0x3c] sm:$0xf]
    %v180 = vld [vmem:[#allocation5] sm:$0xff]
    %v181 = vld [vmem:[#allocation5 + $0x8] sm:$0xff]
    %v182 = vld [vmem:[#allocation5 + $0x10] sm:$0xff]
    %v183 = vld [vmem:[#allocation5 + $0x18] sm:$0xff]
    %v184 = vld [vmem:[#allocation5 + $0x20] sm:$0xff]
    %v185 = vld [vmem:[#allocation5 + $0x28] sm:$0xff]
    %v186 = vld [vmem:[#allocation5 + $0x30] sm:$0xff]
    %v187 = vld [vmem:[#allocation5 + $0x38] sm:$0xff]
    %v188 = vld [vmem:[#allocation5 + $0x40] sm:$0xff]
    %v189 = vld [vmem:[#allocation5 + $0x48] sm:$0xff]
    %v190 = vld [vmem:[#allocation5 + $0x50] sm:$0xff]
    %v191 = vld [vmem:[#allocation5 + $0x58] sm:$0xff]
    %v192 = vld [vmem:[#allocation5 + $0x60] sm:$0xff]
    %v193 = vld [vmem:[#allocation5 + $0x68] sm:$0xff]
    %v194 = vld [vmem:[#allocation5 + $0x70] sm:$0xff]
    %v195 = vld [vmem:[#allocation5 + $0x78] sm:$0xff]
    %v196 = vld [vmem:[#allocation7] sm:$0xf]
    %v197 = vld [vmem:[#allocation7 + $0x4] sm:$0xf]
    %v198 = vld [vmem:[#allocation7 + $0x8] sm:$0xf]
    %v199 = vld [vmem:[#allocation7 + $0xc] sm:$0xf]
    %v200 = vld [vmem:[#allocation7 + $0x10] sm:$0xf]
    %v201 = vld [vmem:[#allocation7 + $0x14] sm:$0xf]
    %v202 = vld [vmem:[#allocation7 + $0x18] sm:$0xf]
    %v203 = vld [vmem:[#allocation7 + $0x1c] sm:$0xf]
    %v204 = vld [vmem:[#allocation7 + $0x20] sm:$0xf]
    %v205 = vld [vmem:[#allocation7 + $0x24] sm:$0xf]
    %v206 = vld [vmem:[#allocation7 + $0x28] sm:$0xf]
    %v207 = vld [vmem:[#allocation7 + $0x2c] sm:$0xf]
    %v208 = vld [vmem:[#allocation7 + $0x30] sm:$0xf]
    %v209 = vld [vmem:[#allocation7 + $0x34] sm:$0xf]
    %v210 = vld [vmem:[#allocation7 + $0x38] sm:$0xf]
    %v211 = vld [vmem:[#allocation7 + $0x3c] sm:$0xf]
    %v212 = vld [vmem:[#allocation8] sm:$0xf]
    %v213 = vld [vmem:[#allocation8 + $0x4] sm:$0xf]
    %v214 = vld [vmem:[#allocation8 + $0x8] sm:$0xf]
    %v215 = vld [vmem:[#allocation8 + $0xc] sm:$0xf]
    %v216 = vld [vmem:[#allocation8 + $0x10] sm:$0xf]
    %v217 = vld [vmem:[#allocation8 + $0x14] sm:$0xf]
    %v218 = vld [vmem:[#allocation8 + $0x18] sm:$0xf]
    %v219 = vld [vmem:[#allocation8 + $0x1c] sm:$0xf]
    %v220 = vld [vmem:[#allocation8 + $0x20] sm:$0xf]
    %v221 = vld [vmem:[#allocation8 + $0x24] sm:$0xf]
    %v222 = vld [vmem:[#allocation8 + $0x28] sm:$0xf]
    %v223 = vld [vmem:[#allocation8 + $0x2c] sm:$0xf]
    %v224 = vld [vmem:[#allocation8 + $0x30] sm:$0xf]
    %v225 = vld [vmem:[#allocation8 + $0x34] sm:$0xf]
    %v226 = vld [vmem:[#allocation8 + $0x38] sm:$0xf]
    %v227 = vld [vmem:[#allocation8 + $0x3c] sm:$0xf]
    %v228 = vld [vmem:[%s4] sm:$0x1]
    %v229 = vpack.c.bf16 %v181, %v180
    %v230 = vpack.c.bf16 %v183, %v182
    %v231 = vpack.c.bf16 %v185, %v184
    %v232 = vpack.c.bf16 %v187, %v186
    %v233 = vpack.c.bf16 %v189, %v188
    %v234 = vpack.c.bf16 %v191, %v190
    %v235 = vpack.c.bf16 %v193, %v192
    %v236 = vpack.c.bf16 %v195, %v194
    %v253 = vunpack.c.l.b16 %v164
    %v254 = vunpack.c.l.b16 %v165
    %v255 = vunpack.c.l.b16 %v166
    %v256 = vunpack.c.l.b16 %v167
    %v257 = vunpack.c.l.b16 %v168
    %v258 = vunpack.c.l.b16 %v169
    %v259 = vunpack.c.l.b16 %v170
    %v260 = vunpack.c.l.b16 %v171
    %v261 = vunpack.c.l.b16 %v172
    %v262 = vunpack.c.l.b16 %v173
    %v263 = vunpack.c.l.b16 %v174
    %v264 = vunpack.c.l.b16 %v175
    %v265 = vunpack.c.l.b16 %v176
    %v266 = vunpack.c.l.b16 %v177
    %v267 = vunpack.c.l.b16 %v178
    %v268 = vunpack.c.l.b16 %v179
    %v269 = vpack.c.b16 %v254, %v253
    %v270 = vpack.c.b16 %v256, %v255
    %v271 = vpack.c.b16 %v258, %v257
    %v272 = vpack.c.b16 %v260, %v259
    %v273 = vpack.c.b16 %v262, %v261
    %v274 = vpack.c.b16 %v264, %v263
    %v275 = vpack.c.b16 %v266, %v265
    %v276 = vpack.c.b16 %v268, %v267
    %285 = vmatpush.bf16.msra.mxu0 %v236
    %286 = vmatpush.bf16.msra.mxu0 %v235
    %287 = vmatpush.bf16.msra.mxu0 %v234
    %288 = vmatpush.bf16.msra.mxu0 %v233
    %289 = vmatpush.bf16.msra.mxu0 %v232
    %290 = vmatpush.bf16.msra.mxu0 %v231
    %291 = vmatpush.bf16.msra.mxu0 %v230
    %292 = vmatpush.bf16.msra.mxu0 %v229
    %293 = vmatmul.bf16.gmra.mxu0 %v269
    %v294 = vpop.f32.mrf.mxu0
    %v295 = vadd.f32 0.0, %v294
    %v296 = vpop.f32.mrf.mxu0
    %v297 = vadd.f32 0.0, %v296
    %298 = vmatmul.bf16.gmra.mxu0 %v270
    %v299 = vpop.f32.mrf.mxu0
    %v300 = vadd.f32 0.0, %v299
    %v301 = vpop.f32.mrf.mxu0
    %v302 = vadd.f32 0.0, %v301
    %303 = vmatmul.bf16.gmra.mxu0 %v271
    %v304 = vpop.f32.mrf.mxu0
    %v305 = vadd.f32 0.0, %v304
    %v306 = vpop.f32.mrf.mxu0
    %v307 = vadd.f32 0.0, %v306
    %308 = vmatmul.bf16.gmra.mxu0 %v272
    %v309 = vpop.f32.mrf.mxu0
    %v310 = vadd.f32 0.0, %v309
    %v311 = vpop.f32.mrf.mxu0
    %v312 = vadd.f32 0.0, %v311
    %313 = vmatmul.bf16.gmra.mxu0 %v273
    %v314 = vpop.f32.mrf.mxu0
    %v315 = vadd.f32 0.0, %v314
    %v316 = vpop.f32.mrf.mxu0
    %v317 = vadd.f32 0.0, %v316
    %318 = vmatmul.bf16.gmra.mxu0 %v274
    %v319 = vpop.f32.mrf.mxu0
    %v320 = vadd.f32 0.0, %v319
    %v321 = vpop.f32.mrf.mxu0
    %v322 = vadd.f32 0.0, %v321
    %323 = vmatmul.bf16.gmra.mxu0 %v275
    %v324 = vpop.f32.mrf.mxu0
    %v325 = vadd.f32 0.0, %v324
    %v326 = vpop.f32.mrf.mxu0
    %v327 = vadd.f32 0.0, %v326
    %328 = vmatmul.bf16.gmra.mxu0 %v276
    %v329 = vpop.f32.mrf.mxu0
    %v330 = vadd.f32 0.0, %v329
    %v331 = vpop.f32.mrf.mxu0
    %v332 = vadd.f32 0.0, %v331
    %333 = vdwg.mxu0
    %v334 = vpack.c.bf16 %v297, %v295
    %v335 = vpack.c.bf16 %v302, %v300
    %v336 = vpack.c.bf16 %v307, %v305
    %v337 = vpack.c.bf16 %v312, %v310
    %v338 = vpack.c.bf16 %v317, %v315
    %v339 = vpack.c.bf16 %v322, %v320
    %v340 = vpack.c.bf16 %v327, %v325
    %v341 = vpack.c.bf16 %v332, %v330
    %v358 = vunpack.c.l.b16 %v212
    %v359 = vunpack.c.l.b16 %v213
    %v360 = vunpack.c.l.b16 %v214
    %v361 = vunpack.c.l.b16 %v215
    %v362 = vunpack.c.l.b16 %v216
    %v363 = vunpack.c.l.b16 %v217
    %v364 = vunpack.c.l.b16 %v218
    %v365 = vunpack.c.l.b16 %v219
    %v366 = vunpack.c.l.b16 %v220
    %v367 = vunpack.c.l.b16 %v221
    %v368 = vunpack.c.l.b16 %v222
    %v369 = vunpack.c.l.b16 %v223
    %v370 = vunpack.c.l.b16 %v224
    %v371 = vunpack.c.l.b16 %v225
    %v372 = vunpack.c.l.b16 %v226
    %v373 = vunpack.c.l.b16 %v227
    %v374 = vpack.c.b16 %v359, %v358
    %v375 = vpack.c.b16 %v361, %v360
    %v376 = vpack.c.b16 %v363, %v362
    %v377 = vpack.c.b16 %v365, %v364
    %v378 = vpack.c.b16 %v367, %v366
    %v379 = vpack.c.b16 %v369, %v368
    %v380 = vpack.c.b16 %v371, %v370
    %v381 = vpack.c.b16 %v373, %v372
    %390 = vmatpush.bf16.msra.mxu0 %v381
    %391 = vmatpush.bf16.msra.mxu0 %v380
    %392 = vmatpush.bf16.msra.mxu0 %v379
    %393 = vmatpush.bf16.msra.mxu0 %v378
    %394 = vmatpush.bf16.msra.mxu0 %v377
    %395 = vmatpush.bf16.msra.mxu0 %v376
    %396 = vmatpush.bf16.msra.mxu0 %v375
    %397 = vmatpush.bf16.msra.mxu0 %v374
    %398 = vmatmul.bf16.gmra.mxu0 %v229
    %v399 = vpop.f32.mrf.mxu0
    %v400 = vadd.f32 0.0, %v399
    %v401 = vpop.f32.mrf.mxu0
    %v402 = vadd.f32 0.0, %v401
    %403 = vmatmul.bf16.gmra.mxu0 %v230
    %v404 = vpop.f32.mrf.mxu0
    %v405 = vadd.f32 0.0, %v404
    %v406 = vpop.f32.mrf.mxu0
    %v407 = vadd.f32 0.0, %v406
    %408 = vmatmul.bf16.gmra.mxu0 %v231
    %v409 = vpop.f32.mrf.mxu0
    %v410 = vadd.f32 0.0, %v409
    %v411 = vpop.f32.mrf.mxu0
    %v412 = vadd.f32 0.0, %v411
    %413 = vmatmul.bf16.gmra.mxu0 %v232
    %v414 = vpop.f32.mrf.mxu0
    %v415 = vadd.f32 0.0, %v414
    %v416 = vpop.f32.mrf.mxu0
    %v417 = vadd.f32 0.0, %v416
    %418 = vmatmul.bf16.gmra.mxu0 %v233
    %v419 = vpop.f32.mrf.mxu0
    %v420 = vadd.f32 0.0, %v419
    %v421 = vpop.f32.mrf.mxu0
    %v422 = vadd.f32 0.0, %v421
    %423 = vmatmul.bf16.gmra.mxu0 %v234
    %v424 = vpop.f32.mrf.mxu0
    %v425 = vadd.f32 0.0, %v424
    %v426 = vpop.f32.mrf.mxu0
    %v427 = vadd.f32 0.0, %v426
    %428 = vmatmul.bf16.gmra.mxu0 %v235
    %v429 = vpop.f32.mrf.mxu0
    %v430 = vadd.f32 0.0, %v429
    %v431 = vpop.f32.mrf.mxu0
    %v432 = vadd.f32 0.0, %v431
    %433 = vmatmul.bf16.gmra.mxu0 %v236
    %v434 = vpop.f32.mrf.mxu0
    %v435 = vadd.f32 0.0, %v434
    %v436 = vpop.f32.mrf.mxu0
    %v437 = vadd.f32 0.0, %v436
    %438 = vdwg.mxu0
    %v455 = vunpack.c.l.b16 %v196
    %v456 = vunpack.c.l.b16 %v197
    %v457 = vunpack.c.l.b16 %v198
    %v458 = vunpack.c.l.b16 %v199
    %v459 = vunpack.c.l.b16 %v200
    %v460 = vunpack.c.l.b16 %v201
    %v461 = vunpack.c.l.b16 %v202
    %v462 = vunpack.c.l.b16 %v203
    %v463 = vunpack.c.l.b16 %v204
    %v464 = vunpack.c.l.b16 %v205
    %v465 = vunpack.c.l.b16 %v206
    %v466 = vunpack.c.l.b16 %v207
    %v467 = vunpack.c.l.b16 %v208
    %v468 = vunpack.c.l.b16 %v209
    %v469 = vunpack.c.l.b16 %v210
    %v470 = vunpack.c.l.b16 %v211
    %v471 = vpack.c.b16 %v456, %v455
    %v472 = vpack.c.b16 %v458, %v457
    %v473 = vpack.c.b16 %v460, %v459
    %v474 = vpack.c.b16 %v462, %v461
    %v475 = vpack.c.b16 %v464, %v463
    %v476 = vpack.c.b16 %v466, %v465
    %v477 = vpack.c.b16 %v468, %v467
    %v478 = vpack.c.b16 %v470, %v469
    %487 = vmatpush.bf16.msra.mxu0 %v478
    %488 = vmatpush.bf16.msra.mxu0 %v477
    %489 = vmatpush.bf16.msra.mxu0 %v476
    %490 = vmatpush.bf16.msra.mxu0 %v475
    %491 = vmatpush.bf16.msra.mxu0 %v474
    %492 = vmatpush.bf16.msra.mxu0 %v473
    %493 = vmatpush.bf16.msra.mxu0 %v472
    %494 = vmatpush.bf16.msra.mxu0 %v471
    %495 = vmatmul.bf16.gmra.mxu0 %v334
    %v496 = vpop.f32.mrf.mxu0
    %v497 = vadd.f32 %v400, %v496
    %v498 = vpop.f32.mrf.mxu0
    %v499 = vadd.f32 %v402, %v498
    %500 = vmatmul.bf16.gmra.mxu0 %v335
    %v501 = vpop.f32.mrf.mxu0
    %v502 = vadd.f32 %v405, %v501
    %v503 = vpop.f32.mrf.mxu0
    %v504 = vadd.f32 %v407, %v503
    %505 = vmatmul.bf16.gmra.mxu0 %v336
    %v506 = vpop.f32.mrf.mxu0
    %v507 = vadd.f32 %v410, %v506
    %v508 = vpop.f32.mrf.mxu0
    %v509 = vadd.f32 %v412, %v508
    %510 = vmatmul.bf16.gmra.mxu0 %v337
    %v511 = vpop.f32.mrf.mxu0
    %v512 = vadd.f32 %v415, %v511
    %v513 = vpop.f32.mrf.mxu0
    %v514 = vadd.f32 %v417, %v513
    %515 = vmatmul.bf16.gmra.mxu0 %v338
    %v516 = vpop.f32.mrf.mxu0
    %v517 = vadd.f32 %v420, %v516
    %v518 = vpop.f32.mrf.mxu0
    %v519 = vadd.f32 %v422, %v518
    %520 = vmatmul.bf16.gmra.mxu0 %v339
    %v521 = vpop.f32.mrf.mxu0
    %v522 = vadd.f32 %v425, %v521
    %v523 = vpop.f32.mrf.mxu0
    %v524 = vadd.f32 %v427, %v523
    %525 = vmatmul.bf16.gmra.mxu0 %v340
    %v526 = vpop.f32.mrf.mxu0
    %v527 = vadd.f32 %v430, %v526
    %v528 = vpop.f32.mrf.mxu0
    %v529 = vadd.f32 %v432, %v528
    %530 = vmatmul.bf16.gmra.mxu0 %v341
    %v531 = vpop.f32.mrf.mxu0
    %v532 = vadd.f32 %v435, %v531
    %v533 = vpop.f32.mrf.mxu0
    %v534 = vadd.f32 %v437, %v533
    %535 = vdwg.mxu0
    %v537 = vperm.slane %v228, 0
    %v539 = vadd.f32 %v497, %v537
    %v540 = vadd.f32 %v499, %v537
    %v541 = vadd.f32 %v502, %v537
    %v542 = vadd.f32 %v504, %v537
    %v543 = vadd.f32 %v507, %v537
    %v544 = vadd.f32 %v509, %v537
    %v545 = vadd.f32 %v512, %v537
    %v546 = vadd.f32 %v514, %v537
    %v547 = vadd.f32 %v517, %v537
    %v548 = vadd.f32 %v519, %v537
    %v549 = vadd.f32 %v522, %v537
    %v550 = vadd.f32 %v524, %v537
    %v551 = vadd.f32 %v527, %v537
    %v552 = vadd.f32 %v529, %v537
    %v553 = vadd.f32 %v532, %v537
    %v554 = vadd.f32 %v534, %v537
    %v555 = vmax.f32 %v539, 0.0
    %v556 = vmax.f32 %v540, 0.0
    %v557 = vmax.f32 %v541, 0.0
    %v558 = vmax.f32 %v542, 0.0
    %v559 = vmax.f32 %v543, 0.0
    %v560 = vmax.f32 %v544, 0.0
    %v561 = vmax.f32 %v545, 0.0
    %v562 = vmax.f32 %v546, 0.0
    %v563 = vmax.f32 %v547, 0.0
    %v564 = vmax.f32 %v548, 0.0
    %v565 = vmax.f32 %v549, 0.0
    %v566 = vmax.f32 %v550, 0.0
    %v567 = vmax.f32 %v551, 0.0
    %v568 = vmax.f32 %v552, 0.0
    %v569 = vmax.f32 %v553, 0.0
    %v570 = vmax.f32 %v554, 0.0
    %v571 = vld [vmem:[#allocation10] sm:$0xf]
    %v572 = vld [vmem:[#allocation10 + $0x4] sm:$0xf]
    %v573 = vld [vmem:[#allocation10 + $0x8] sm:$0xf]
    %v574 = vld [vmem:[#allocation10 + $0xc] sm:$0xf]
    %v575 = vld [vmem:[#allocation10 + $0x10] sm:$0xf]
    %v576 = vld [vmem:[#allocation10 + $0x14] sm:$0xf]
    %v577 = vld [vmem:[#allocation10 + $0x18] sm:$0xf]
    %v578 = vld [vmem:[#allocation10 + $0x1c] sm:$0xf]
    %v579 = vld [vmem:[#allocation10 + $0x20] sm:$0xf]
    %v580 = vld [vmem:[#allocation10 + $0x24] sm:$0xf]
    %v581 = vld [vmem:[#allocation10 + $0x28] sm:$0xf]
    %v582 = vld [vmem:[#allocation10 + $0x2c] sm:$0xf]
    %v583 = vld [vmem:[#allocation10 + $0x30] sm:$0xf]
    %v584 = vld [vmem:[#allocation10 + $0x34] sm:$0xf]
    %v585 = vld [vmem:[#allocation10 + $0x38] sm:$0xf]
    %v586 = vld [vmem:[#allocation10 + $0x3c] sm:$0xf]
    %v587 = vld [vmem:[#allocation11] sm:$0xf]
    %v588 = vld [vmem:[#allocation11 + $0x4] sm:$0xf]
    %v589 = vld [vmem:[#allocation11 + $0x8] sm:$0xf]
    %v590 = vld [vmem:[#allocation11 + $0xc] sm:$0xf]
    %v591 = vld [vmem:[#allocation11 + $0x10] sm:$0xf]
    %v592 = vld [vmem:[#allocation11 + $0x14] sm:$0xf]
    %v593 = vld [vmem:[#allocation11 + $0x18] sm:$0xf]
    %v594 = vld [vmem:[#allocation11 + $0x1c] sm:$0xf]
    %v595 = vld [vmem:[#allocation11 + $0x20] sm:$0xf]
    %v596 = vld [vmem:[#allocation11 + $0x24] sm:$0xf]
    %v597 = vld [vmem:[#allocation11 + $0x28] sm:$0xf]
    %v598 = vld [vmem:[#allocation11 + $0x2c] sm:$0xf]
    %v599 = vld [vmem:[#allocation11 + $0x30] sm:$0xf]
    %v600 = vld [vmem:[#allocation11 + $0x34] sm:$0xf]
    %v601 = vld [vmem:[#allocation11 + $0x38] sm:$0xf]
    %v602 = vld [vmem:[#allocation11 + $0x3c] sm:$0xf]
    %v603 = vld [vmem:[%s7] sm:$0x1]
    %v604 = vpack.c.bf16 %v556, %v555
    %v605 = vpack.c.bf16 %v558, %v557
    %v606 = vpack.c.bf16 %v560, %v559
    %v607 = vpack.c.bf16 %v562, %v561
    %v608 = vpack.c.bf16 %v564, %v563
    %v609 = vpack.c.bf16 %v566, %v565
    %v610 = vpack.c.bf16 %v568, %v567
    %v611 = vpack.c.bf16 %v570, %v569
    %612 = vmatpush.bf16.msra.mxu0 %v611
    %613 = vmatpush.bf16.msra.mxu0 %v610
    %614 = vmatpush.bf16.msra.mxu0 %v609
    %615 = vmatpush.bf16.msra.mxu0 %v608
    %616 = vmatpush.bf16.msra.mxu0 %v607
    %617 = vmatpush.bf16.msra.mxu0 %v606
    %618 = vmatpush.bf16.msra.mxu0 %v605
    %619 = vmatpush.bf16.msra.mxu0 %v604
    %620 = vmatmul.bf16.gmra.mxu0 %v269
    %v621 = vpop.f32.mrf.mxu0
    %v622 = vadd.f32 0.0, %v621
    %v623 = vpop.f32.mrf.mxu0
    %v624 = vadd.f32 0.0, %v623
    %625 = vmatmul.bf16.gmra.mxu0 %v270
    %v626 = vpop.f32.mrf.mxu0
    %v627 = vadd.f32 0.0, %v626
    %v628 = vpop.f32.mrf.mxu0
    %v629 = vadd.f32 0.0, %v628
    %630 = vmatmul.bf16.gmra.mxu0 %v271
    %v631 = vpop.f32.mrf.mxu0
    %v632 = vadd.f32 0.0, %v631
    %v633 = vpop.f32.mrf.mxu0
    %v634 = vadd.f32 0.0, %v633
    %635 = vmatmul.bf16.gmra.mxu0 %v272
    %v636 = vpop.f32.mrf.mxu0
    %v637 = vadd.f32 0.0, %v636
    %v638 = vpop.f32.mrf.mxu0
    %v639 = vadd.f32 0.0, %v638
    %640 = vmatmul.bf16.gmra.mxu0 %v273
    %v641 = vpop.f32.mrf.mxu0
    %v642 = vadd.f32 0.0, %v641
    %v643 = vpop.f32.mrf.mxu0
    %v644 = vadd.f32 0.0, %v643
    %645 = vmatmul.bf16.gmra.mxu0 %v274
    %v646 = vpop.f32.mrf.mxu0
    %v647 = vadd.f32 0.0, %v646
    %v648 = vpop.f32.mrf.mxu0
    %v649 = vadd.f32 0.0, %v648
    %650 = vmatmul.bf16.gmra.mxu0 %v275
    %v651 = vpop.f32.mrf.mxu0
    %v652 = vadd.f32 0.0, %v651
    %v653 = vpop.f32.mrf.mxu0
    %v654 = vadd.f32 0.0, %v653
    %655 = vmatmul.bf16.gmra.mxu0 %v276
    %v656 = vpop.f32.mrf.mxu0
    %v657 = vadd.f32 0.0, %v656
    %v658 = vpop.f32.mrf.mxu0
    %v659 = vadd.f32 0.0, %v658
    %660 = vdwg.mxu0
    %v661 = vpack.c.bf16 %v624, %v622
    %v662 = vpack.c.bf16 %v629, %v627
    %v663 = vpack.c.bf16 %v634, %v632
    %v664 = vpack.c.bf16 %v639, %v637
    %v665 = vpack.c.bf16 %v644, %v642
    %v666 = vpack.c.bf16 %v649, %v647
    %v667 = vpack.c.bf16 %v654, %v652
    %v668 = vpack.c.bf16 %v659, %v657
    %v685 = vunpack.c.l.b16 %v587
    %v686 = vunpack.c.l.b16 %v588
    %v687 = vunpack.c.l.b16 %v589
    %v688 = vunpack.c.l.b16 %v590
    %v689 = vunpack.c.l.b16 %v591
    %v690 = vunpack.c.l.b16 %v592
    %v691 = vunpack.c.l.b16 %v593
    %v692 = vunpack.c.l.b16 %v594
    %v693 = vunpack.c.l.b16 %v595
    %v694 = vunpack.c.l.b16 %v596
    %v695 = vunpack.c.l.b16 %v597
    %v696 = vunpack.c.l.b16 %v598
    %v697 = vunpack.c.l.b16 %v599
    %v698 = vunpack.c.l.b16 %v600
    %v699 = vunpack.c.l.b16 %v601
    %v700 = vunpack.c.l.b16 %v602
    %v701 = vpack.c.b16 %v686, %v685
    %v702 = vpack.c.b16 %v688, %v687
    %v703 = vpack.c.b16 %v690, %v689
    %v704 = vpack.c.b16 %v692, %v691
    %v705 = vpack.c.b16 %v694, %v693
    %v706 = vpack.c.b16 %v696, %v695
    %v707 = vpack.c.b16 %v698, %v697
    %v708 = vpack.c.b16 %v700, %v699
    %717 = vmatpush.bf16.msra.mxu0 %v708
    %718 = vmatpush.bf16.msra.mxu0 %v707
    %719 = vmatpush.bf16.msra.mxu0 %v706
    %720 = vmatpush.bf16.msra.mxu0 %v705
    %721 = vmatpush.bf16.msra.mxu0 %v704
    %722 = vmatpush.bf16.msra.mxu0 %v703
    %723 = vmatpush.bf16.msra.mxu0 %v702
    %724 = vmatpush.bf16.msra.mxu0 %v701
    %725 = vmatmul.bf16.gmra.mxu0 %v604
    %v726 = vpop.f32.mrf.mxu0
    %v727 = vadd.f32 0.0, %v726
    %v728 = vpop.f32.mrf.mxu0
    %v729 = vadd.f32 0.0, %v728
    %730 = vmatmul.bf16.gmra.mxu0 %v605
    %v731 = vpop.f32.mrf.mxu0
    %v732 = vadd.f32 0.0, %v731
    %v733 = vpop.f32.mrf.mxu0
    %v734 = vadd.f32 0.0, %v733
    %735 = vmatmul.bf16.gmra.mxu0 %v606
    %v736 = vpop.f32.mrf.mxu0
    %v737 = vadd.f32 0.0, %v736
    %v738 = vpop.f32.mrf.mxu0
    %v739 = vadd.f32 0.0, %v738
    %740 = vmatmul.bf16.gmra.mxu0 %v607
    %v741 = vpop.f32.mrf.mxu0
    %v742 = vadd.f32 0.0, %v741
    %v743 = vpop.f32.mrf.mxu0
    %v744 = vadd.f32 0.0, %v743
    %745 = vmatmul.bf16.gmra.mxu0 %v608
    %v746 = vpop.f32.mrf.mxu0
    %v747 = vadd.f32 0.0, %v746
    %v748 = vpop.f32.mrf.mxu0
    %v749 = vadd.f32 0.0, %v748
    %750 = vmatmul.bf16.gmra.mxu0 %v609
    %v751 = vpop.f32.mrf.mxu0
    %v752 = vadd.f32 0.0, %v751
    %v753 = vpop.f32.mrf.mxu0
    %v754 = vadd.f32 0.0, %v753
    %755 = vmatmul.bf16.gmra.mxu0 %v610
    %v756 = vpop.f32.mrf.mxu0
    %v757 = vadd.f32 0.0, %v756
    %v758 = vpop.f32.mrf.mxu0
    %v759 = vadd.f32 0.0, %v758
    %760 = vmatmul.bf16.gmra.mxu0 %v611
    %v761 = vpop.f32.mrf.mxu0
    %v762 = vadd.f32 0.0, %v761
    %v763 = vpop.f32.mrf.mxu0
    %v764 = vadd.f32 0.0, %v763
    %765 = vdwg.mxu0
    %v782 = vunpack.c.l.b16 %v571
    %v783 = vunpack.c.l.b16 %v572
    %v784 = vunpack.c.l.b16 %v573
    %v785 = vunpack.c.l.b16 %v574
    %v786 = vunpack.c.l.b16 %v575
    %v787 = vunpack.c.l.b16 %v576
    %v788 = vunpack.c.l.b16 %v577
    %v789 = vunpack.c.l.b16 %v578
    %v790 = vunpack.c.l.b16 %v579
    %v791 = vunpack.c.l.b16 %v580
    %v792 = vunpack.c.l.b16 %v581
    %v793 = vunpack.c.l.b16 %v582
    %v794 = vunpack.c.l.b16 %v583
    %v795 = vunpack.c.l.b16 %v584
    %v796 = vunpack.c.l.b16 %v585
    %v797 = vunpack.c.l.b16 %v586
    %v798 = vpack.c.b16 %v783, %v782
    %v799 = vpack.c.b16 %v785, %v784
    %v800 = vpack.c.b16 %v787, %v786
    %v801 = vpack.c.b16 %v789, %v788
    %v802 = vpack.c.b16 %v791, %v790
    %v803 = vpack.c.b16 %v793, %v792
    %v804 = vpack.c.b16 %v795, %v794
    %v805 = vpack.c.b16 %v797, %v796
    %814 = vmatpush.bf16.msra.mxu0 %v805
    %815 = vmatpush.bf16.msra.mxu0 %v804
    %816 = vmatpush.bf16.msra.mxu0 %v803
    %817 = vmatpush.bf16.msra.mxu0 %v802
    %818 = vmatpush.bf16.msra.mxu0 %v801
    %819 = vmatpush.bf16.msra.mxu0 %v800
    %820 = vmatpush.bf16.msra.mxu0 %v799
    %821 = vmatpush.bf16.msra.mxu0 %v798
    %822 = vmatmul.bf16.gmra.mxu0 %v661
    %v823 = vpop.f32.mrf.mxu0
    %v824 = vadd.f32 %v727, %v823
    %v825 = vpop.f32.mrf.mxu0
    %v826 = vadd.f32 %v729, %v825
    %827 = vmatmul.bf16.gmra.mxu0 %v662
    %v828 = vpop.f32.mrf.mxu0
    %v829 = vadd.f32 %v732, %v828
    %v830 = vpop.f32.mrf.mxu0
    %v831 = vadd.f32 %v734, %v830
    %832 = vmatmul.bf16.gmra.mxu0 %v663
    %v833 = vpop.f32.mrf.mxu0
    %v834 = vadd.f32 %v737, %v833
    %v835 = vpop.f32.mrf.mxu0
    %v836 = vadd.f32 %v739, %v835
    %837 = vmatmul.bf16.gmra.mxu0 %v664
    %v838 = vpop.f32.mrf.mxu0
    %v839 = vadd.f32 %v742, %v838
    %v840 = vpop.f32.mrf.mxu0
    %v841 = vadd.f32 %v744, %v840
    %842 = vmatmul.bf16.gmra.mxu0 %v665
    %v843 = vpop.f32.mrf.mxu0
    %v844 = vadd.f32 %v747, %v843
    %v845 = vpop.f32.mrf.mxu0
    %v846 = vadd.f32 %v749, %v845
    %847 = vmatmul.bf16.gmra.mxu0 %v666
    %v848 = vpop.f32.mrf.mxu0
    %v849 = vadd.f32 %v752, %v848
    %v850 = vpop.f32.mrf.mxu0
    %v851 = vadd.f32 %v754, %v850
    %852 = vmatmul.bf16.gmra.mxu0 %v667
    %v853 = vpop.f32.mrf.mxu0
    %v854 = vadd.f32 %v757, %v853
    %v855 = vpop.f32.mrf.mxu0
    %v856 = vadd.f32 %v759, %v855
    %857 = vmatmul.bf16.gmra.mxu0 %v668
    %v858 = vpop.f32.mrf.mxu0
    %v859 = vadd.f32 %v762, %v858
    %v860 = vpop.f32.mrf.mxu0
    %v861 = vadd.f32 %v764, %v860
    %862 = vdwg.mxu0
    %v864 = vperm.slane %v603, 0
    %v866 = vadd.f32 %v824, %v864
    %v867 = vadd.f32 %v826, %v864
    %v868 = vadd.f32 %v829, %v864
    %v869 = vadd.f32 %v831, %v864
    %v870 = vadd.f32 %v834, %v864
    %v871 = vadd.f32 %v836, %v864
    %v872 = vadd.f32 %v839, %v864
    %v873 = vadd.f32 %v841, %v864
    %v874 = vadd.f32 %v844, %v864
    %v875 = vadd.f32 %v846, %v864
    %v876 = vadd.f32 %v849, %v864
    %v877 = vadd.f32 %v851, %v864
    %v878 = vadd.f32 %v854, %v864
    %v879 = vadd.f32 %v856, %v864
    %v880 = vadd.f32 %v859, %v864
    %v881 = vadd.f32 %v861, %v864
    %v882 = vmax.f32 %v866, 0.0
    %v883 = vmax.f32 %v867, 0.0
    %v884 = vmax.f32 %v868, 0.0
    %v885 = vmax.f32 %v869, 0.0
    %v886 = vmax.f32 %v870, 0.0
    %v887 = vmax.f32 %v871, 0.0
    %v888 = vmax.f32 %v872, 0.0
    %v889 = vmax.f32 %v873, 0.0
    %v890 = vmax.f32 %v874, 0.0
    %v891 = vmax.f32 %v875, 0.0
    %v892 = vmax.f32 %v876, 0.0
    %v893 = vmax.f32 %v877, 0.0
    %v894 = vmax.f32 %v878, 0.0
    %v895 = vmax.f32 %v879, 0.0
    %v896 = vmax.f32 %v880, 0.0
    %v897 = vmax.f32 %v881, 0.0
    %v898 = vld [vmem:[#allocation13] sm:$0xf]
    %v899 = vld [vmem:[#allocation13 + $0x4] sm:$0xf]
    %v900 = vld [vmem:[#allocation13 + $0x8] sm:$0xf]
    %v901 = vld [vmem:[#allocation13 + $0xc] sm:$0xf]
    %v902 = vld [vmem:[#allocation13 + $0x10] sm:$0xf]
    %v903 = vld [vmem:[#allocation13 + $0x14] sm:$0xf]
    %v904 = vld [vmem:[#allocation13 + $0x18] sm:$0xf]
    %v905 = vld [vmem:[#allocation13 + $0x1c] sm:$0xf]
    %v906 = vld [vmem:[#allocation13 + $0x20] sm:$0xf]
    %v907 = vld [vmem:[#allocation13 + $0x24] sm:$0xf]
    %v908 = vld [vmem:[#allocation13 + $0x28] sm:$0xf]
    %v909 = vld [vmem:[#allocation13 + $0x2c] sm:$0xf]
    %v910 = vld [vmem:[#allocation13 + $0x30] sm:$0xf]
    %v911 = vld [vmem:[#allocation13 + $0x34] sm:$0xf]
    %v912 = vld [vmem:[#allocation13 + $0x38] sm:$0xf]
    %v913 = vld [vmem:[#allocation13 + $0x3c] sm:$0xf]
    %v914 = vld [vmem:[#allocation14] sm:$0xf]
    %v915 = vld [vmem:[#allocation14 + $0x4] sm:$0xf]
    %v916 = vld [vmem:[#allocation14 + $0x8] sm:$0xf]
    %v917 = vld [vmem:[#allocation14 + $0xc] sm:$0xf]
    %v918 = vld [vmem:[#allocation14 + $0x10] sm:$0xf]
    %v919 = vld [vmem:[#allocation14 + $0x14] sm:$0xf]
    %v920 = vld [vmem:[#allocation14 + $0x18] sm:$0xf]
    %v921 = vld [vmem:[#allocation14 + $0x1c] sm:$0xf]
    %v922 = vld [vmem:[#allocation14 + $0x20] sm:$0xf]
    %v923 = vld [vmem:[#allocation14 + $0x24] sm:$0xf]
    %v924 = vld [vmem:[#allocation14 + $0x28] sm:$0xf]
    %v925 = vld [vmem:[#allocation14 + $0x2c] sm:$0xf]
    %v926 = vld [vmem:[#allocation14 + $0x30] sm:$0xf]
    %v927 = vld [vmem:[#allocation14 + $0x34] sm:$0xf]
    %v928 = vld [vmem:[#allocation14 + $0x38] sm:$0xf]
    %v929 = vld [vmem:[#allocation14 + $0x3c] sm:$0xf]
    %v930 = vld [vmem:[%s10] sm:$0x1]
    %v931 = vpack.c.bf16 %v883, %v882
    %v932 = vpack.c.bf16 %v885, %v884
    %v933 = vpack.c.bf16 %v887, %v886
    %v934 = vpack.c.bf16 %v889, %v888
    %v935 = vpack.c.bf16 %v891, %v890
    %v936 = vpack.c.bf16 %v893, %v892
    %v937 = vpack.c.bf16 %v895, %v894
    %v938 = vpack.c.bf16 %v897, %v896
    %939 = vmatpush.bf16.msra.mxu0 %v938
    %940 = vmatpush.bf16.msra.mxu0 %v937
    %941 = vmatpush.bf16.msra.mxu0 %v936
    %942 = vmatpush.bf16.msra.mxu0 %v935
    %943 = vmatpush.bf16.msra.mxu0 %v934
    %944 = vmatpush.bf16.msra.mxu0 %v933
    %945 = vmatpush.bf16.msra.mxu0 %v932
    %946 = vmatpush.bf16.msra.mxu0 %v931
    %947 = vmatmul.bf16.gmra.mxu0 %v269
    %v948 = vpop.f32.mrf.mxu0
    %v949 = vadd.f32 0.0, %v948
    %v950 = vpop.f32.mrf.mxu0
    %v951 = vadd.f32 0.0, %v950
    %952 = vmatmul.bf16.gmra.mxu0 %v270
    %v953 = vpop.f32.mrf.mxu0
    %v954 = vadd.f32 0.0, %v953
    %v955 = vpop.f32.mrf.mxu0
    %v956 = vadd.f32 0.0, %v955
    %957 = vmatmul.bf16.gmra.mxu0 %v271
    %v958 = vpop.f32.mrf.mxu0
    %v959 = vadd.f32 0.0, %v958
    %v960 = vpop.f32.mrf.mxu0
    %v961 = vadd.f32 0.0, %v960
    %962 = vmatmul.bf16.gmra.mxu0 %v272
    %v963 = vpop.f32.mrf.mxu0
    %v964 = vadd.f32 0.0, %v963
    %v965 = vpop.f32.mrf.mxu0
    %v966 = vadd.f32 0.0, %v965
    %967 = vmatmul.bf16.gmra.mxu0 %v273
    %v968 = vpop.f32.mrf.mxu0
    %v969 = vadd.f32 0.0, %v968
    %v970 = vpop.f32.mrf.mxu0
    %v971 = vadd.f32 0.0, %v970
    %972 = vmatmul.bf16.gmra.mxu0 %v274
    %v973 = vpop.f32.mrf.mxu0
    %v974 = vadd.f32 0.0, %v973
    %v975 = vpop.f32.mrf.mxu0
    %v976 = vadd.f32 0.0, %v975
    %977 = vmatmul.bf16.gmra.mxu0 %v275
    %v978 = vpop.f32.mrf.mxu0
    %v979 = vadd.f32 0.0, %v978
    %v980 = vpop.f32.mrf.mxu0
    %v981 = vadd.f32 0.0, %v980
    %982 = vmatmul.bf16.gmra.mxu0 %v276
    %v983 = vpop.f32.mrf.mxu0
    %v984 = vadd.f32 0.0, %v983
    %v985 = vpop.f32.mrf.mxu0
    %v986 = vadd.f32 0.0, %v985
    %987 = vdwg.mxu0
    %v988 = vpack.c.bf16 %v951, %v949
    %v989 = vpack.c.bf16 %v956, %v954
    %v990 = vpack.c.bf16 %v961, %v959
    %v991 = vpack.c.bf16 %v966, %v964
    %v992 = vpack.c.bf16 %v971, %v969
    %v993 = vpack.c.bf16 %v976, %v974
    %v994 = vpack.c.bf16 %v981, %v979
    %v995 = vpack.c.bf16 %v986, %v984
    %v1012 = vunpack.c.l.b16 %v914
    %v1013 = vunpack.c.l.b16 %v915
    %v1014 = vunpack.c.l.b16 %v916
    %v1015 = vunpack.c.l.b16 %v917
    %v1016 = vunpack.c.l.b16 %v918
    %v1017 = vunpack.c.l.b16 %v919
    %v1018 = vunpack.c.l.b16 %v920
    %v1019 = vunpack.c.l.b16 %v921
    %v1020 = vunpack.c.l.b16 %v922
    %v1021 = vunpack.c.l.b16 %v923
    %v1022 = vunpack.c.l.b16 %v924
    %v1023 = vunpack.c.l.b16 %v925
    %v1024 = vunpack.c.l.b16 %v926
    %v1025 = vunpack.c.l.b16 %v927
    %v1026 = vunpack.c.l.b16 %v928
    %v1027 = vunpack.c.l.b16 %v929
    %v1028 = vpack.c.b16 %v1013, %v1012
    %v1029 = vpack.c.b16 %v1015, %v1014
    %v1030 = vpack.c.b16 %v1017, %v1016
    %v1031 = vpack.c.b16 %v1019, %v1018
    %v1032 = vpack.c.b16 %v1021, %v1020
    %v1033 = vpack.c.b16 %v1023, %v1022
    %v1034 = vpack.c.b16 %v1025, %v1024
    %v1035 = vpack.c.b16 %v1027, %v1026
    %1044 = vmatpush.bf16.msra.mxu0 %v1035
    %1045 = vmatpush.bf16.msra.mxu0 %v1034
    %1046 = vmatpush.bf16.msra.mxu0 %v1033
    %1047 = vmatpush.bf16.msra.mxu0 %v1032
    %1048 = vmatpush.bf16.msra.mxu0 %v1031
    %1049 = vmatpush.bf16.msra.mxu0 %v1030
    %1050 = vmatpush.bf16.msra.mxu0 %v1029
    %1051 = vmatpush.bf16.msra.mxu0 %v1028
    %1052 = vmatmul.bf16.gmra.mxu0 %v931
    %v1053 = vpop.f32.mrf.mxu0
    %v1054 = vadd.f32 0.0, %v1053
    %v1055 = vpop.f32.mrf.mxu0
    %v1056 = vadd.f32 0.0, %v1055
    %1057 = vmatmul.bf16.gmra.mxu0 %v932
    %v1058 = vpop.f32.mrf.mxu0
    %v1059 = vadd.f32 0.0, %v1058
    %v1060 = vpop.f32.mrf.mxu0
    %v1061 = vadd.f32 0.0, %v1060
    %1062 = vmatmul.bf16.gmra.mxu0 %v933
    %v1063 = vpop.f32.mrf.mxu0
    %v1064 = vadd.f32 0.0, %v1063
    %v1065 = vpop.f32.mrf.mxu0
    %v1066 = vadd.f32 0.0, %v1065
    %1067 = vmatmul.bf16.gmra.mxu0 %v934
    %v1068 = vpop.f32.mrf.mxu0
    %v1069 = vadd.f32 0.0, %v1068
    %v1070 = vpop.f32.mrf.mxu0
    %v1071 = vadd.f32 0.0, %v1070
    %1072 = vmatmul.bf16.gmra.mxu0 %v935
    %v1073 = vpop.f32.mrf.mxu0
    %v1074 = vadd.f32 0.0, %v1073
    %v1075 = vpop.f32.mrf.mxu0
    %v1076 = vadd.f32 0.0, %v1075
    %1077 = vmatmul.bf16.gmra.mxu0 %v936
    %v1078 = vpop.f32.mrf.mxu0
    %v1079 = vadd.f32 0.0, %v1078
    %v1080 = vpop.f32.mrf.mxu0
    %v1081 = vadd.f32 0.0, %v1080
    %1082 = vmatmul.bf16.gmra.mxu0 %v937
    %v1083 = vpop.f32.mrf.mxu0
    %v1084 = vadd.f32 0.0, %v1083
    %v1085 = vpop.f32.mrf.mxu0
    %v1086 = vadd.f32 0.0, %v1085
    %1087 = vmatmul.bf16.gmra.mxu0 %v938
    %v1088 = vpop.f32.mrf.mxu0
    %v1089 = vadd.f32 0.0, %v1088
    %v1090 = vpop.f32.mrf.mxu0
    %v1091 = vadd.f32 0.0, %v1090
    %1092 = vdwg.mxu0
    %v1109 = vunpack.c.l.b16 %v898
    %v1110 = vunpack.c.l.b16 %v899
    %v1111 = vunpack.c.l.b16 %v900
    %v1112 = vunpack.c.l.b16 %v901
    %v1113 = vunpack.c.l.b16 %v902
    %v1114 = vunpack.c.l.b16 %v903
    %v1115 = vunpack.c.l.b16 %v904
    %v1116 = vunpack.c.l.b16 %v905
    %v1117 = vunpack.c.l.b16 %v906
    %v1118 = vunpack.c.l.b16 %v907
    %v1119 = vunpack.c.l.b16 %v908
    %v1120 = vunpack.c.l.b16 %v909
    %v1121 = vunpack.c.l.b16 %v910
    %v1122 = vunpack.c.l.b16 %v911
    %v1123 = vunpack.c.l.b16 %v912
    %v1124 = vunpack.c.l.b16 %v913
    %v1125 = vpack.c.b16 %v1110, %v1109
    %v1126 = vpack.c.b16 %v1112, %v1111
    %v1127 = vpack.c.b16 %v1114, %v1113
    %v1128 = vpack.c.b16 %v1116, %v1115
    %v1129 = vpack.c.b16 %v1118, %v1117
    %v1130 = vpack.c.b16 %v1120, %v1119
    %v1131 = vpack.c.b16 %v1122, %v1121
    %v1132 = vpack.c.b16 %v1124, %v1123
    %1141 = vmatpush.bf16.msra.mxu0 %v1132
    %1142 = vmatpush.bf16.msra.mxu0 %v1131
    %1143 = vmatpush.bf16.msra.mxu0 %v1130
    %1144 = vmatpush.bf16.msra.mxu0 %v1129
    %1145 = vmatpush.bf16.msra.mxu0 %v1128
    %1146 = vmatpush.bf16.msra.mxu0 %v1127
    %1147 = vmatpush.bf16.msra.mxu0 %v1126
    %1148 = vmatpush.bf16.msra.mxu0 %v1125
    %1149 = vmatmul.bf16.gmra.mxu0 %v988
    %v1150 = vpop.f32.mrf.mxu0
    %v1151 = vadd.f32 %v1054, %v1150
    %v1152 = vpop.f32.mrf.mxu0
    %v1153 = vadd.f32 %v1056, %v1152
    %1154 = vmatmul.bf16.gmra.mxu0 %v989
    %v1155 = vpop.f32.mrf.mxu0
    %v1156 = vadd.f32 %v1059, %v1155
    %v1157 = vpop.f32.mrf.mxu0
    %v1158 = vadd.f32 %v1061, %v1157
    %1159 = vmatmul.bf16.gmra.mxu0 %v990
    %v1160 = vpop.f32.mrf.mxu0
    %v1161 = vadd.f32 %v1064, %v1160
    %v1162 = vpop.f32.mrf.mxu0
    %v1163 = vadd.f32 %v1066, %v1162
    %1164 = vmatmul.bf16.gmra.mxu0 %v991
    %v1165 = vpop.f32.mrf.mxu0
    %v1166 = vadd.f32 %v1069, %v1165
    %v1167 = vpop.f32.mrf.mxu0
    %v1168 = vadd.f32 %v1071, %v1167
    %1169 = vmatmul.bf16.gmra.mxu0 %v992
    %v1170 = vpop.f32.mrf.mxu0
    %v1171 = vadd.f32 %v1074, %v1170
    %v1172 = vpop.f32.mrf.mxu0
    %v1173 = vadd.f32 %v1076, %v1172
    %1174 = vmatmul.bf16.gmra.mxu0 %v993
    %v1175 = vpop.f32.mrf.mxu0
    %v1176 = vadd.f32 %v1079, %v1175
    %v1177 = vpop.f32.mrf.mxu0
    %v1178 = vadd.f32 %v1081, %v1177
    %1179 = vmatmul.bf16.gmra.mxu0 %v994
    %v1180 = vpop.f32.mrf.mxu0
    %v1181 = vadd.f32 %v1084, %v1180
    %v1182 = vpop.f32.mrf.mxu0
    %v1183 = vadd.f32 %v1086, %v1182
    %1184 = vmatmul.bf16.gmra.mxu0 %v995
    %v1185 = vpop.f32.mrf.mxu0
    %v1186 = vadd.f32 %v1089, %v1185
    %v1187 = vpop.f32.mrf.mxu0
    %v1188 = vadd.f32 %v1091, %v1187
    %1189 = vdwg.mxu0
    %v1191 = vperm.slane %v930, 0
    %v1193 = vadd.f32 %v1151, %v1191
    %v1194 = vadd.f32 %v1153, %v1191
    %v1195 = vadd.f32 %v1156, %v1191
    %v1196 = vadd.f32 %v1158, %v1191
    %v1197 = vadd.f32 %v1161, %v1191
    %v1198 = vadd.f32 %v1163, %v1191
    %v1199 = vadd.f32 %v1166, %v1191
    %v1200 = vadd.f32 %v1168, %v1191
    %v1201 = vadd.f32 %v1171, %v1191
    %v1202 = vadd.f32 %v1173, %v1191
    %v1203 = vadd.f32 %v1176, %v1191
    %v1204 = vadd.f32 %v1178, %v1191
    %v1205 = vadd.f32 %v1181, %v1191
    %v1206 = vadd.f32 %v1183, %v1191
    %v1207 = vadd.f32 %v1186, %v1191
    %v1208 = vadd.f32 %v1188, %v1191
    %v1209 = vlaneseq
    %v1210 = vand.u32 %v1209, 127
    %vm1211 = vcmp.lt.s32.totalorder %v1210, 8
    %v1212 = vsel %vm1211, %v1193, -1e+30
    %v1213 = vsel %vm1211, %v1194, -1e+30
    %v1214 = vsel %vm1211, %v1195, -1e+30
    %v1215 = vsel %vm1211, %v1196, -1e+30
    %v1216 = vsel %vm1211, %v1197, -1e+30
    %v1217 = vsel %vm1211, %v1198, -1e+30
    %v1218 = vsel %vm1211, %v1199, -1e+30
    %v1219 = vsel %vm1211, %v1200, -1e+30
    %v1220 = vsel %vm1211, %v1201, -1e+30
    %v1221 = vsel %vm1211, %v1202, -1e+30
    %v1222 = vsel %vm1211, %v1203, -1e+30
    %v1223 = vsel %vm1211, %v1204, -1e+30
    %v1224 = vsel %vm1211, %v1205, -1e+30
    %v1225 = vsel %vm1211, %v1206, -1e+30
    %v1226 = vsel %vm1211, %v1207, -1e+30
    %v1227 = vsel %vm1211, %v1208, -1e+30
    %1228 = vmax.xlane.f32.xlu0 %v1212
    %v1229 = vpop.xlane.xlu0 %1228
    %1230 = vmax.xlane.f32.xlu0 %v1213
    %v1231 = vpop.xlane.xlu0 %1230
    %1232 = vmax.xlane.f32.xlu0 %v1214
    %v1233 = vpop.xlane.xlu0 %1232
    %1234 = vmax.xlane.f32.xlu0 %v1215
    %v1235 = vpop.xlane.xlu0 %1234
    %1236 = vmax.xlane.f32.xlu0 %v1216
    %v1237 = vpop.xlane.xlu0 %1236
    %1238 = vmax.xlane.f32.xlu0 %v1217
    %v1239 = vpop.xlane.xlu0 %1238
    %1240 = vmax.xlane.f32.xlu0 %v1218
    %v1241 = vpop.xlane.xlu0 %1240
    %1242 = vmax.xlane.f32.xlu0 %v1219
    %v1243 = vpop.xlane.xlu0 %1242
    %1244 = vmax.xlane.f32.xlu0 %v1220
    %v1245 = vpop.xlane.xlu0 %1244
    %1246 = vmax.xlane.f32.xlu0 %v1221
    %v1247 = vpop.xlane.xlu0 %1246
    %1248 = vmax.xlane.f32.xlu0 %v1222
    %v1249 = vpop.xlane.xlu0 %1248
    %1250 = vmax.xlane.f32.xlu0 %v1223
    %v1251 = vpop.xlane.xlu0 %1250
    %1252 = vmax.xlane.f32.xlu0 %v1224
    %v1253 = vpop.xlane.xlu0 %1252
    %1254 = vmax.xlane.f32.xlu0 %v1225
    %v1255 = vpop.xlane.xlu0 %1254
    %1256 = vmax.xlane.f32.xlu0 %v1226
    %v1257 = vpop.xlane.xlu0 %1256
    %1258 = vmax.xlane.f32.xlu0 %v1227
    %v1259 = vpop.xlane.xlu0 %1258
    %v1260 = vsub.f32 %v1212, %v1229
    %v1261 = vsub.f32 %v1213, %v1231
    %v1262 = vsub.f32 %v1214, %v1233
    %v1263 = vsub.f32 %v1215, %v1235
    %v1264 = vsub.f32 %v1216, %v1237
    %v1265 = vsub.f32 %v1217, %v1239
    %v1266 = vsub.f32 %v1218, %v1241
    %v1267 = vsub.f32 %v1219, %v1243
    %v1268 = vsub.f32 %v1220, %v1245
    %v1269 = vsub.f32 %v1221, %v1247
    %v1270 = vsub.f32 %v1222, %v1249
    %v1271 = vsub.f32 %v1223, %v1251
    %v1272 = vsub.f32 %v1224, %v1253
    %v1273 = vsub.f32 %v1225, %v1255
    %v1274 = vsub.f32 %v1226, %v1257
    %v1275 = vsub.f32 %v1227, %v1259
    %v1276 = vmul.f32 %v1260, 1.442695
    %v1277 = vpow.pop %v1276
    %v1278 = vmul.f32 %v1261, 1.442695
    %v1279 = vpow.pop %v1278
    %v1280 = vmul.f32 %v1262, 1.442695
    %v1281 = vpow.pop %v1280
    %v1282 = vmul.f32 %v1263, 1.442695
    %v1283 = vpow.pop %v1282
    %v1284 = vmul.f32 %v1264, 1.442695
    %v1285 = vpow.pop %v1284
    %v1286 = vmul.f32 %v1265, 1.442695
    %v1287 = vpow.pop %v1286
    %v1288 = vmul.f32 %v1266, 1.442695
    %v1289 = vpow.pop %v1288
    %v1290 = vmul.f32 %v1267, 1.442695
    %v1291 = vpow.pop %v1290
    %v1292 = vmul.f32 %v1268, 1.442695
    %v1293 = vpow.pop %v1292
    %v1294 = vmul.f32 %v1269, 1.442695
    %v1295 = vpow.pop %v1294
    %v1296 = vmul.f32 %v1270, 1.442695
    %v1297 = vpow.pop %v1296
    %v1298 = vmul.f32 %v1271, 1.442695
    %v1299 = vpow.pop %v1298
    %v1300 = vmul.f32 %v1272, 1.442695
    %v1301 = vpow.pop %v1300
    %v1302 = vmul.f32 %v1273, 1.442695
    %v1303 = vpow.pop %v1302
    %v1304 = vmul.f32 %v1274, 1.442695
    %v1305 = vpow.pop %v1304
    %v1306 = vmul.f32 %v1275, 1.442695
    %v1307 = vpow.pop %v1306
    %1308 = vadd.xlane.f32.xlu0 %v1277
    %v1309 = vpop.xlane.xlu0 %1308
    %1310 = vadd.xlane.f32.xlu0 %v1279
    %v1311 = vpop.xlane.xlu0 %1310
    %1312 = vadd.xlane.f32.xlu0 %v1281
    %v1313 = vpop.xlane.xlu0 %1312
    %1314 = vadd.xlane.f32.xlu0 %v1283
    %v1315 = vpop.xlane.xlu0 %1314
    %1316 = vadd.xlane.f32.xlu0 %v1285
    %v1317 = vpop.xlane.xlu0 %1316
    %1318 = vadd.xlane.f32.xlu0 %v1287
    %v1319 = vpop.xlane.xlu0 %1318
    %1320 = vadd.xlane.f32.xlu0 %v1289
    %v1321 = vpop.xlane.xlu0 %1320
    %1322 = vadd.xlane.f32.xlu0 %v1291
    %v1323 = vpop.xlane.xlu0 %1322
    %1324 = vadd.xlane.f32.xlu0 %v1293
    %v1325 = vpop.xlane.xlu0 %1324
    %1326 = vadd.xlane.f32.xlu0 %v1295
    %v1327 = vpop.xlane.xlu0 %1326
    %1328 = vadd.xlane.f32.xlu0 %v1297
    %v1329 = vpop.xlane.xlu0 %1328
    %1330 = vadd.xlane.f32.xlu0 %v1299
    %v1331 = vpop.xlane.xlu0 %1330
    %1332 = vadd.xlane.f32.xlu0 %v1301
    %v1333 = vpop.xlane.xlu0 %1332
    %1334 = vadd.xlane.f32.xlu0 %v1303
    %v1335 = vpop.xlane.xlu0 %1334
    %1336 = vadd.xlane.f32.xlu0 %v1305
    %v1337 = vpop.xlane.xlu0 %1336
    %1338 = vadd.xlane.f32.xlu0 %v1307
    %v1339 = vpop.xlane.xlu0 %1338
    %v1340 = vlog2.pop %v1309
    %v1341 = vmul.f32 %v1340, 0.6931472
    %v1342 = vlog2.pop %v1311
    %v1343 = vmul.f32 %v1342, 0.6931472
    %v1344 = vlog2.pop %v1313
    %v1345 = vmul.f32 %v1344, 0.6931472
    %v1346 = vlog2.pop %v1315
    %v1347 = vmul.f32 %v1346, 0.6931472
    %v1348 = vlog2.pop %v1317
    %v1349 = vmul.f32 %v1348, 0.6931472
    %v1350 = vlog2.pop %v1319
    %v1351 = vmul.f32 %v1350, 0.6931472
    %v1352 = vlog2.pop %v1321
    %v1353 = vmul.f32 %v1352, 0.6931472
    %v1354 = vlog2.pop %v1323
    %v1355 = vmul.f32 %v1354, 0.6931472
    %v1356 = vlog2.pop %v1325
    %v1357 = vmul.f32 %v1356, 0.6931472
    %v1358 = vlog2.pop %v1327
    %v1359 = vmul.f32 %v1358, 0.6931472
    %v1360 = vlog2.pop %v1329
    %v1361 = vmul.f32 %v1360, 0.6931472
    %v1362 = vlog2.pop %v1331
    %v1363 = vmul.f32 %v1362, 0.6931472
    %v1364 = vlog2.pop %v1333
    %v1365 = vmul.f32 %v1364, 0.6931472
    %v1366 = vlog2.pop %v1335
    %v1367 = vmul.f32 %v1366, 0.6931472
    %v1368 = vlog2.pop %v1337
    %v1369 = vmul.f32 %v1368, 0.6931472
    %v1370 = vlog2.pop %v1339
    %v1371 = vmul.f32 %v1370, 0.6931472
    %v1372 = vsub.f32 %v1260, %v1341
    %v1373 = vsub.f32 %v1261, %v1343
    %v1374 = vsub.f32 %v1262, %v1345
    %v1375 = vsub.f32 %v1263, %v1347
    %v1376 = vsub.f32 %v1264, %v1349
    %v1377 = vsub.f32 %v1265, %v1351
    %v1378 = vsub.f32 %v1266, %v1353
    %v1379 = vsub.f32 %v1267, %v1355
    %v1380 = vsub.f32 %v1268, %v1357
    %v1381 = vsub.f32 %v1269, %v1359
    %v1382 = vsub.f32 %v1270, %v1361
    %v1383 = vsub.f32 %v1271, %v1363
    %v1384 = vsub.f32 %v1272, %v1365
    %v1385 = vsub.f32 %v1273, %v1367
    %v1386 = vsub.f32 %v1274, %v1369
    %v1387 = vsub.f32 %v1275, %v1371
    %1388 = vst [vmem:[#allocation16] sm:$0xff] %v1372
    %1389 = vst [vmem:[#allocation16 + $0x8] sm:$0xff] %v1373
    %1390 = vst [vmem:[#allocation16 + $0x10] sm:$0xff] %v1374
    %1391 = vst [vmem:[#allocation16 + $0x18] sm:$0xff] %v1375
    %1392 = vst [vmem:[#allocation16 + $0x20] sm:$0xff] %v1376
    %1393 = vst [vmem:[#allocation16 + $0x28] sm:$0xff] %v1377
    %1394 = vst [vmem:[#allocation16 + $0x30] sm:$0xff] %v1378
    %1395 = vst [vmem:[#allocation16 + $0x38] sm:$0xff] %v1379
    %1396 = vst [vmem:[#allocation16 + $0x40] sm:$0xff] %v1380
    %1397 = vst [vmem:[#allocation16 + $0x48] sm:$0xff] %v1381
    %1398 = vst [vmem:[#allocation16 + $0x50] sm:$0xff] %v1382
    %1399 = vst [vmem:[#allocation16 + $0x58] sm:$0xff] %v1383
    %1400 = vst [vmem:[#allocation16 + $0x60] sm:$0xff] %v1384
    %1401 = vst [vmem:[#allocation16 + $0x68] sm:$0xff] %v1385
    %1402 = vst [vmem:[#allocation16 + $0x70] sm:$0xff] %v1386
    %1403 = vst [vmem:[#allocation16 + $0x78] sm:$0xff] %v1387
    // Predicated region
    $region78: #{tpu_custom_call.1} parent=1 // pred_check
      _
    $region79: #{tpu_custom_call.1} parent=1 // pred_check_branch
      %1405 = sbr.rel (0) target = $region81
    $region80: #{tpu_custom_call.1} parent=1 // pred_region
      %1407 = vsyncadd [#allocation4], 0
      %s1408 = sshll.u32 [#allocation16], 4
      %s1409 = int_to_ptr.vmem [resolvable:$true] %s1408
      %s1410 = sshll.u32 %s11, 4
      %s1411 = int_to_ptr.hbm [resolvable:$true] %s1410
      %1416 = dma.vmem_to_hbm [thread:$0]  %s1409, 2048, %s1411, [#allocation4], 128, 128, 8
    $region81: #{tpu_custom_call.1} parent=1 // pred_fallthru
      _
    // Predicated region
    $region82: #{tpu_custom_call.1} parent=1 // pred_check
      _
    $region83: #{tpu_custom_call.1} parent=1 // pred_check_branch
      %1418 = sbr.rel (0) target = $region85
    $region84: #{tpu_custom_call.1} parent=1 // pred_region
      %1420 = dma.done [#allocation4], 2048
    $region85: #{tpu_custom_call.1} parent=1 // pred_fallthru
      _
    %1421 = vsyncpa [#allocation3], 1
    %1422 = vsyncpa [#allocation6], 1
    %1423 = vsyncpa [#allocation9], 1
    %1424 = vsyncpa [#allocation12], 1
    %1425 = vsyncpa [#allocation15], 1
    %1426 = vsyncpa [#allocation4], 1

</llo_original>
